<compile_context>
chip_gen: v6e
topology: v6e:2x2x1
jax: 0.10.0
libtpu: 0.0.40
codegen_flags: <defaults>
</compile_context>

<pallas_src>
import jax
import jax.numpy as jnp
from jax.experimental import pallas as pl
from jax.experimental.pallas import tpu as pltpu


_VMEM = pl.BlockSpec(memory_space=pltpu.MemorySpace.VMEM)


def _round_up(x, m):
    return ((x + m - 1) // m) * m


# ----------------------------- Pallas kernel --------------------------------


def _make_fused_kernel(num_layers, T, Bp, H):
    """Fused multi-layer LSTM (wavefront over time) + output projection.

    Ref layout (inputs..., output):
      x_ref:     (T*Bp, D)   time-major, batch-padded input (f32)
      w_ih0:     (D, 4H)     bf16   layer-0 input weights (gate-packed columns)
      w_hh0:     (H, 4H)     bf16   layer-0 recurrent weights
      b0:        (1, 4H)     f32    layer-0 fused bias
      per layer l >= 1:
        w_cat_l: (2H, 4H)    bf16   stacked [W_ih_l ; W_hh_l]
        b_l:     (1, 4H)     f32
      lin_w:     (1, H)      f32    output head row vector
      lin_b:     (1, 1)      f32
      out_ref:   (Bp, 128)   f32    prediction broadcast across lanes
    """
    G = 4 * H  # packed gate width (128 for H=32)

    def cell(gates, c):
        # One packed sigmoid (covers i, f, o) + one packed tanh (covers g).
        s = jax.nn.sigmoid(gates)                      # (Bp, 4H)
        tg = jnp.tanh(gates)                           # (Bp, 4H)
        i_g = s[:, 0 * H:1 * H]
        f_g = s[:, 1 * H:2 * H]
        g_g = tg[:, 2 * H:3 * H]
        o_g = s[:, 3 * H:4 * H]
        c_new = f_g * c + i_g * g_g                    # (Bp, H) f32
        h_new = o_g * jnp.tanh(c_new)                  # (Bp, H) f32
        return h_new, c_new

    def kernel(*refs):
        x_ref, w_ih0_ref, w_hh0_ref, b0_ref = refs[0:4]
        cat_refs = refs[4:4 + 2 * (num_layers - 1)]
        lin_w_ref = refs[4 + 2 * (num_layers - 1)]
        lin_b_ref = refs[5 + 2 * (num_layers - 1)]
        out_ref = refs[6 + 2 * (num_layers - 1)]

        # Hoisted layer-0 input projection + bias: one MXU matmul for all T steps.
        xproj = jnp.dot(x_ref[...].astype(jnp.bfloat16), w_ih0_ref[...],
                        preferred_element_type=jnp.float32) + b0_ref[...]  # (T*Bp, 4H)

        # Load recurrent weights once; they stay resident for the whole time loop.
        w_hh0 = w_hh0_ref[...]                                       # (H, 4H) bf16
        w_cat = [cat_refs[2 * l][...] for l in range(num_layers - 1)]
        b_cat = [cat_refs[2 * l + 1][...] for l in range(num_layers - 1)]

        h = [jnp.zeros((Bp, H), jnp.float32) for _ in range(num_layers)]
        c = [jnp.zeros((Bp, H), jnp.float32) for _ in range(num_layers)]

        # Wavefront: inside one t every layer updates in turn, so in the unrolled
        # schedule layer l's step-t work overlaps layer l-1's step-(t+1) work and no
        # inter-layer activation buffer is needed.
        for t in range(T):                                           # static unroll
            g0 = xproj[t * Bp:(t + 1) * Bp] + jnp.dot(
                h[0].astype(jnp.bfloat16), w_hh0,
                preferred_element_type=jnp.float32)                  # (Bp, 4H)
            h[0], c[0] = cell(g0, c[0])
            for l in range(1, num_layers):
                # Fused input+recurrent projection: [h_{l-1,t}, h_{l,t-1}] @ [Wih;Whh]
                inp = jnp.concatenate([h[l - 1], h[l]],
                                      axis=-1).astype(jnp.bfloat16)  # (Bp, 2H)
                gl = b_cat[l - 1] + jnp.dot(inp, w_cat[l - 1],
                                            preferred_element_type=jnp.float32)
                h[l], c[l] = cell(gl, c[l])

        # Output head as VPU multiply + lane reduction; widen to 128 lanes so the
        # store is a whole, unmasked vreg tile (wrapper slices column 0).
        pred = jnp.sum(h[-1] * lin_w_ref[...], axis=-1, keepdims=True) \
            + lin_b_ref[...]                                         # (Bp, 1)
        out_ref[...] = jnp.broadcast_to(pred, (Bp, 128))

    return kernel


def _fused_forward(x2, params, T, Bp):
    layers = params["layers"]
    num_layers = len(layers)
    H = layers[0]["w_hh"].shape[0]
    flat = [layers[0]["w_ih"], layers[0]["w_hh"], layers[0]["b"]]
    for lp in layers[1:]:
        flat += [lp["w_cat"], lp["b"]]
    kernel = _make_fused_kernel(num_layers, T, Bp, H)
    return pl.pallas_call(
        kernel,
        out_shape=jax.ShapeDtypeStruct((Bp, 128), jnp.float32),
        in_specs=[_VMEM] * (1 + len(flat) + 2),
        out_specs=_VMEM,
    )(x2, *flat, params["lin_w"], params["lin_b"])


# ------------------------------ JAX wrappers ---------------------------------


def init_params(key, input_size, hidden_size, num_layers):
    """PyTorch-style U(-1/sqrt(H), 1/sqrt(H)) init.

    Returns (kernel_params, raw): kernel_params holds pre-transposed, gate-packed
    bf16 weights in the layout the fused kernel consumes (layer 0: w_ih/w_hh/b,
    layers >= 1: stacked w_cat/b); raw keeps plain f32 PyTorch-layout weights used
    only by the pure-JAX reference in __main__.
    """
    H = hidden_size
    bound = 1.0 / (float(H) ** 0.5)
    layers, raw_layers = [], []
    for layer in range(num_layers):
        d_in = input_size if layer == 0 else H
        key, k1, k2, k3, k4 = jax.random.split(key, 5)
        w_ih = jax.random.uniform(k1, (4 * H, d_in), jnp.float32, -bound, bound)
        w_hh = jax.random.uniform(k2, (4 * H, H), jnp.float32, -bound, bound)
        b_ih = jax.random.uniform(k3, (4 * H,), jnp.float32, -bound, bound)
        b_hh = jax.random.uniform(k4, (4 * H,), jnp.float32, -bound, bound)
        raw_layers.append({"w_ih": w_ih, "w_hh": w_hh, "b_ih": b_ih, "b_hh": b_hh})

        b = (b_ih + b_hh)[None, :]                                    # (1, 4H) f32
        if layer == 0:
            layers.append({"w_ih": w_ih.T.astype(jnp.bfloat16),       # (D, 4H)
                           "w_hh": w_hh.T.astype(jnp.bfloat16),       # (H, 4H)
                           "b": b})
        else:
            w_cat = jnp.concatenate([w_ih.T, w_hh.T], axis=0)         # (2H, 4H)
            layers.append({"w_cat": w_cat.astype(jnp.bfloat16), "b": b})

    key, k5, k6 = jax.random.split(key, 3)
    lin_w = jax.random.uniform(k5, (1, H), jnp.float32, -bound, bound)
    lin_b = jax.random.uniform(k6, (1,), jnp.float32, -bound, bound)

    params = {"layers": layers, "lin_w": lin_w, "lin_b": lin_b[None, :]}
    raw = {"layers": raw_layers, "lin_w": lin_w, "lin_b": lin_b}
    return params, raw


@jax.jit
def multivariate_lstm_forward(params, x_btd):
    """x_btd: (B, T, input_size) float32 -> predictions (B, 1) float32."""
    B, T, D = x_btd.shape
    Bp = _round_up(B, 8)                                      # f32 sublane tile
    x = jnp.transpose(x_btd.astype(jnp.float32), (1, 0, 2))   # (T, B, D) time-major
    x = jnp.pad(x, ((0, 0), (0, Bp - B), (0, 0)))             # (T, Bp, D)
    x2 = x.reshape(T * Bp, D)                                 # layout-preserving
    out = _fused_forward(x2, params, T, Bp)                   # (Bp, 128)
    return out[:B, :1]


# ------------------------ pure-JAX reference (for check) ----------------------


def _reference_forward(raw, x_btd):
    """Eval-mode nn.LSTM(batch_first) + nn.Linear(H, 1) in plain f32 JAX."""
    x = x_btd.astype(jnp.float32)
    B, T, _ = x.shape
    H = raw["layers"][0]["w_hh"].shape[1]
    layer_in = x
    for lp in raw["layers"]:
        w_ih, w_hh = lp["w_ih"], lp["w_hh"]
        b = lp["b_ih"] + lp["b_hh"]
        h = jnp.zeros((B, H), jnp.float32)
        c = jnp.zeros((B, H), jnp.float32)
        outs = []
        for t in range(T):
            g = layer_in[:, t, :] @ w_ih.T + h @ w_hh.T + b
            i = jax.nn.sigmoid(g[:, 0:H])
            f = jax.nn.sigmoid(g[:, H:2 * H])
            gg = jnp.tanh(g[:, 2 * H:3 * H])
            o = jax.nn.sigmoid(g[:, 3 * H:4 * H])
            c = f * c + i * gg
            h = o * jnp.tanh(c)
            outs.append(h)
        layer_in = jnp.stack(outs, axis=1)
    return layer_in[:, -1, :] @ raw["lin_w"].T + raw["lin_b"]


# --------------------------------- main ---------------------------------------

if __name__ == "__main__":
    batch = 2
    seq = 8
    input_size = 4
    hidden_size = 32
    num_layers = 2

    key = jax.random.PRNGKey(0)
    key_x, key_p = jax.random.split(key)
    x = jax.random.normal(key_x, (batch, seq, input_size), jnp.float32)
    params, raw = init_params(key_p, input_size, hidden_size, num_layers)

    preds = multivariate_lstm_forward(params, x)
    preds = jax.block_until_ready(preds)
    assert preds.shape == (batch, 1), preds.shape

    ref = _reference_forward(raw, x)
    max_err = float(jnp.max(jnp.abs(preds - ref)))
    assert max_err < 3e-2, f"kernel deviates from reference: max_abs_err={max_err}"

    print("KERNEL_OK")
</pallas_src>

<mosaic_0001>
module attributes {stable_mosaic.version = 11 : i64} {
  func.func @kernel(%arg0: memref<64x4xf32, #tpu.memory_space<vmem>>, %arg1: memref<4x128xbf16, #tpu.memory_space<vmem>>, %arg2: memref<32x128xbf16, #tpu.memory_space<vmem>>, %arg3: memref<1x128xf32, #tpu.memory_space<vmem>>, %arg4: memref<64x128xbf16, #tpu.memory_space<vmem>>, %arg5: memref<1x128xf32, #tpu.memory_space<vmem>>, %arg6: memref<1x32xf32, #tpu.memory_space<vmem>>, %arg7: memref<1x1xf32, #tpu.memory_space<vmem>>, %arg8: memref<8x128xf32, #tpu.memory_space<vmem>>) attributes {dimension_semantics = [], scalar_prefetch = 0 : i64, scratch_operands = 0 : i64, tpu.core_type = #tpu.core_type<tc>} {
    %c0 = arith.constant 0 : index
    %c0_0 = arith.constant 0 : index
    %0 = vector.load %arg0[%c0, %c0_0] : memref<64x4xf32, #tpu.memory_space<vmem>>, vector<64x4xf32>
    %1 = arith.truncf %0 : vector<64x4xf32> to vector<64x4xbf16>
    %c0_1 = arith.constant 0 : index
    %c0_2 = arith.constant 0 : index
    %2 = vector.load %arg1[%c0_1, %c0_2] : memref<4x128xbf16, #tpu.memory_space<vmem>>, vector<4x128xbf16>
    %cst = arith.constant dense<0.000000e+00> : vector<64x128xf32>
    %3 = tpu.matmul %1, %2, %cst {dimension_numbers = #tpu.dot_dimension_numbers<[1], [0], [0], [1], [0, 0, 1, 1], [], []>} : vector<64x4xbf16>, vector<4x128xbf16>, vector<64x128xf32> -> vector<64x128xf32>
    %c0_3 = arith.constant 0 : index
    %c0_4 = arith.constant 0 : index
    %4 = vector.load %arg3[%c0_3, %c0_4] : memref<1x128xf32, #tpu.memory_space<vmem>>, vector<1x128xf32>
    %5 = vector.broadcast %4 : vector<1x128xf32> to vector<64x128xf32>
    %6 = arith.addf %3, %5 : vector<64x128xf32>
    %c0_5 = arith.constant 0 : index
    %c0_6 = arith.constant 0 : index
    %7 = vector.load %arg2[%c0_5, %c0_6] : memref<32x128xbf16, #tpu.memory_space<vmem>>, vector<32x128xbf16>
    %c0_7 = arith.constant 0 : index
    %c0_8 = arith.constant 0 : index
    %8 = vector.load %arg4[%c0_7, %c0_8] : memref<64x128xbf16, #tpu.memory_space<vmem>>, vector<64x128xbf16>
    %c0_9 = arith.constant 0 : index
    %c0_10 = arith.constant 0 : index
    %9 = vector.load %arg5[%c0_9, %c0_10] : memref<1x128xf32, #tpu.memory_space<vmem>>, vector<1x128xf32>
    %cst_11 = arith.constant 0.000000e+00 : f32
    %10 = vector.broadcast %cst_11 : f32 to vector<8x32xf32>
    %cst_12 = arith.constant 0.000000e+00 : f32
    %11 = vector.broadcast %cst_12 : f32 to vector<8x32xf32>
    %cst_13 = arith.constant 0.000000e+00 : f32
    %12 = vector.broadcast %cst_13 : f32 to vector<8x32xf32>
    %cst_14 = arith.constant 0.000000e+00 : f32
    %13 = vector.broadcast %cst_14 : f32 to vector<8x32xf32>
    %14 = vector.extract_strided_slice %6 {offsets = [0, 0], sizes = [8, 128], strides = [1, 1]} : vector<64x128xf32> to vector<8x128xf32>
    %15 = arith.truncf %10 : vector<8x32xf32> to vector<8x32xbf16>
    %cst_15 = arith.constant dense<0.000000e+00> : vector<8x128xf32>
    %16 = tpu.matmul %15, %7, %cst_15 {dimension_numbers = #tpu.dot_dimension_numbers<[1], [0], [0], [1], [0, 0, 1, 1], [], []>} : vector<8x32xbf16>, vector<32x128xbf16>, vector<8x128xf32> -> vector<8x128xf32>
    %17 = arith.addf %14, %16 : vector<8x128xf32>
    %18 = arith.negf %17 : vector<8x128xf32>
    %19 = math.exp %18 : vector<8x128xf32>
    %cst_16 = arith.constant 1.000000e+00 : f32
    %20 = vector.broadcast %cst_16 : f32 to vector<8x128xf32>
    %21 = arith.addf %20, %19 : vector<8x128xf32>
    %22 = arith.divf %20, %21 : vector<8x128xf32>
    %23 = math.tanh %17 : vector<8x128xf32>
    %24 = vector.extract_strided_slice %22 {offsets = [0, 0], sizes = [8, 32], strides = [1, 1]} : vector<8x128xf32> to vector<8x32xf32>
    %25 = vector.extract_strided_slice %22 {offsets = [0, 32], sizes = [8, 32], strides = [1, 1]} : vector<8x128xf32> to vector<8x32xf32>
    %26 = vector.extract_strided_slice %23 {offsets = [0, 64], sizes = [8, 32], strides = [1, 1]} : vector<8x128xf32> to vector<8x32xf32>
    %27 = vector.extract_strided_slice %22 {offsets = [0, 96], sizes = [8, 32], strides = [1, 1]} : vector<8x128xf32> to vector<8x32xf32>
    %28 = arith.mulf %25, %12 : vector<8x32xf32>
    %29 = arith.mulf %24, %26 : vector<8x32xf32>
    %30 = arith.addf %28, %29 : vector<8x32xf32>
    %31 = math.tanh %30 : vector<8x32xf32>
    %32 = arith.mulf %27, %31 : vector<8x32xf32>
    %33 = tpu.concatenate %32, %11 in 1 : vector<8x32xf32>, vector<8x32xf32> -> vector<8x64xf32>
    %34 = arith.truncf %33 : vector<8x64xf32> to vector<8x64xbf16>
    %cst_17 = arith.constant dense<0.000000e+00> : vector<8x128xf32>
    %35 = tpu.matmul %34, %8, %cst_17 {dimension_numbers = #tpu.dot_dimension_numbers<[1], [0], [0], [1], [0, 0, 1, 1], [], []>} : vector<8x64xbf16>, vector<64x128xbf16>, vector<8x128xf32> -> vector<8x128xf32>
    %36 = vector.broadcast %9 : vector<1x128xf32> to vector<8x128xf32>
    %37 = arith.addf %36, %35 : vector<8x128xf32>
    %38 = arith.negf %37 : vector<8x128xf32>
    %39 = math.exp %38 : vector<8x128xf32>
    %cst_18 = arith.constant 1.000000e+00 : f32
    %40 = vector.broadcast %cst_18 : f32 to vector<8x128xf32>
    %41 = arith.addf %40, %39 : vector<8x128xf32>
    %42 = arith.divf %40, %41 : vector<8x128xf32>
    %43 = math.tanh %37 : vector<8x128xf32>
    %44 = vector.extract_strided_slice %42 {offsets = [0, 0], sizes = [8, 32], strides = [1, 1]} : vector<8x128xf32> to vector<8x32xf32>
    %45 = vector.extract_strided_slice %42 {offsets = [0, 32], sizes = [8, 32], strides = [1, 1]} : vector<8x128xf32> to vector<8x32xf32>
    %46 = vector.extract_strided_slice %43 {offsets = [0, 64], sizes = [8, 32], strides = [1, 1]} : vector<8x128xf32> to vector<8x32xf32>
    %47 = vector.extract_strided_slice %42 {offsets = [0, 96], sizes = [8, 32], strides = [1, 1]} : vector<8x128xf32> to vector<8x32xf32>
    %48 = arith.mulf %45, %13 : vector<8x32xf32>
    %49 = arith.mulf %44, %46 : vector<8x32xf32>
    %50 = arith.addf %48, %49 : vector<8x32xf32>
    %51 = math.tanh %50 : vector<8x32xf32>
    %52 = arith.mulf %47, %51 : vector<8x32xf32>
    %53 = vector.extract_strided_slice %6 {offsets = [8, 0], sizes = [8, 128], strides = [1, 1]} : vector<64x128xf32> to vector<8x128xf32>
    %54 = arith.truncf %32 : vector<8x32xf32> to vector<8x32xbf16>
    %cst_19 = arith.constant dense<0.000000e+00> : vector<8x128xf32>
    %55 = tpu.matmul %54, %7, %cst_19 {dimension_numbers = #tpu.dot_dimension_numbers<[1], [0], [0], [1], [0, 0, 1, 1], [], []>} : vector<8x32xbf16>, vector<32x128xbf16>, vector<8x128xf32> -> vector<8x128xf32>
    %56 = arith.addf %53, %55 : vector<8x128xf32>
    %57 = arith.negf %56 : vector<8x128xf32>
    %58 = math.exp %57 : vector<8x128xf32>
    %cst_20 = arith.constant 1.000000e+00 : f32
    %59 = vector.broadcast %cst_20 : f32 to vector<8x128xf32>
    %60 = arith.addf %59, %58 : vector<8x128xf32>
    %61 = arith.divf %59, %60 : vector<8x128xf32>
    %62 = math.tanh %56 : vector<8x128xf32>
    %63 = vector.extract_strided_slice %61 {offsets = [0, 0], sizes = [8, 32], strides = [1, 1]} : vector<8x128xf32> to vector<8x32xf32>
    %64 = vector.extract_strided_slice %61 {offsets = [0, 32], sizes = [8, 32], strides = [1, 1]} : vector<8x128xf32> to vector<8x32xf32>
    %65 = vector.extract_strided_slice %62 {offsets = [0, 64], sizes = [8, 32], strides = [1, 1]} : vector<8x128xf32> to vector<8x32xf32>
    %66 = vector.extract_strided_slice %61 {offsets = [0, 96], sizes = [8, 32], strides = [1, 1]} : vector<8x128xf32> to vector<8x32xf32>
    %67 = arith.mulf %64, %30 : vector<8x32xf32>
    %68 = arith.mulf %63, %65 : vector<8x32xf32>
    %69 = arith.addf %67, %68 : vector<8x32xf32>
    %70 = math.tanh %69 : vector<8x32xf32>
    %71 = arith.mulf %66, %70 : vector<8x32xf32>
    %72 = tpu.concatenate %71, %52 in 1 : vector<8x32xf32>, vector<8x32xf32> -> vector<8x64xf32>
    %73 = arith.truncf %72 : vector<8x64xf32> to vector<8x64xbf16>
    %cst_21 = arith.constant dense<0.000000e+00> : vector<8x128xf32>
    %74 = tpu.matmul %73, %8, %cst_21 {dimension_numbers = #tpu.dot_dimension_numbers<[1], [0], [0], [1], [0, 0, 1, 1], [], []>} : vector<8x64xbf16>, vector<64x128xbf16>, vector<8x128xf32> -> vector<8x128xf32>
    %75 = vector.broadcast %9 : vector<1x128xf32> to vector<8x128xf32>
    %76 = arith.addf %75, %74 : vector<8x128xf32>
    %77 = arith.negf %76 : vector<8x128xf32>
    %78 = math.exp %77 : vector<8x128xf32>
    %cst_22 = arith.constant 1.000000e+00 : f32
    %79 = vector.broadcast %cst_22 : f32 to vector<8x128xf32>
    %80 = arith.addf %79, %78 : vector<8x128xf32>
    %81 = arith.divf %79, %80 : vector<8x128xf32>
    %82 = math.tanh %76 : vector<8x128xf32>
    %83 = vector.extract_strided_slice %81 {offsets = [0, 0], sizes = [8, 32], strides = [1, 1]} : vector<8x128xf32> to vector<8x32xf32>
    %84 = vector.extract_strided_slice %81 {offsets = [0, 32], sizes = [8, 32], strides = [1, 1]} : vector<8x128xf32> to vector<8x32xf32>
    %85 = vector.extract_strided_slice %82 {offsets = [0, 64], sizes = [8, 32], strides = [1, 1]} : vector<8x128xf32> to vector<8x32xf32>
    %86 = vector.extract_strided_slice %81 {offsets = [0, 96], sizes = [8, 32], strides = [1, 1]} : vector<8x128xf32> to vector<8x32xf32>
    %87 = arith.mulf %84, %50 : vector<8x32xf32>
    %88 = arith.mulf %83, %85 : vector<8x32xf32>
    %89 = arith.addf %87, %88 : vector<8x32xf32>
    %90 = math.tanh %89 : vector<8x32xf32>
    %91 = arith.mulf %86, %90 : vector<8x32xf32>
    %92 = vector.extract_strided_slice %6 {offsets = [16, 0], sizes = [8, 128], strides = [1, 1]} : vector<64x128xf32> to vector<8x128xf32>
    %93 = arith.truncf %71 : vector<8x32xf32> to vector<8x32xbf16>
    %cst_23 = arith.constant dense<0.000000e+00> : vector<8x128xf32>
    %94 = tpu.matmul %93, %7, %cst_23 {dimension_numbers = #tpu.dot_dimension_numbers<[1], [0], [0], [1], [0, 0, 1, 1], [], []>} : vector<8x32xbf16>, vector<32x128xbf16>, vector<8x128xf32> -> vector<8x128xf32>
    %95 = arith.addf %92, %94 : vector<8x128xf32>
    %96 = arith.negf %95 : vector<8x128xf32>
    %97 = math.exp %96 : vector<8x128xf32>
    %cst_24 = arith.constant 1.000000e+00 : f32
    %98 = vector.broadcast %cst_24 : f32 to vector<8x128xf32>
    %99 = arith.addf %98, %97 : vector<8x128xf32>
    %100 = arith.divf %98, %99 : vector<8x128xf32>
    %101 = math.tanh %95 : vector<8x128xf32>
    %102 = vector.extract_strided_slice %100 {offsets = [0, 0], sizes = [8, 32], strides = [1, 1]} : vector<8x128xf32> to vector<8x32xf32>
    %103 = vector.extract_strided_slice %100 {offsets = [0, 32], sizes = [8, 32], strides = [1, 1]} : vector<8x128xf32> to vector<8x32xf32>
    %104 = vector.extract_strided_slice %101 {offsets = [0, 64], sizes = [8, 32], strides = [1, 1]} : vector<8x128xf32> to vector<8x32xf32>
    %105 = vector.extract_strided_slice %100 {offsets = [0, 96], sizes = [8, 32], strides = [1, 1]} : vector<8x128xf32> to vector<8x32xf32>
    %106 = arith.mulf %103, %69 : vector<8x32xf32>
    %107 = arith.mulf %102, %104 : vector<8x32xf32>
    %108 = arith.addf %106, %107 : vector<8x32xf32>
    %109 = math.tanh %108 : vector<8x32xf32>
    %110 = arith.mulf %105, %109 : vector<8x32xf32>
    %111 = tpu.concatenate %110, %91 in 1 : vector<8x32xf32>, vector<8x32xf32> -> vector<8x64xf32>
    %112 = arith.truncf %111 : vector<8x64xf32> to vector<8x64xbf16>
    %cst_25 = arith.constant dense<0.000000e+00> : vector<8x128xf32>
    %113 = tpu.matmul %112, %8, %cst_25 {dimension_numbers = #tpu.dot_dimension_numbers<[1], [0], [0], [1], [0, 0, 1, 1], [], []>} : vector<8x64xbf16>, vector<64x128xbf16>, vector<8x128xf32> -> vector<8x128xf32>
    %114 = vector.broadcast %9 : vector<1x128xf32> to vector<8x128xf32>
    %115 = arith.addf %114, %113 : vector<8x128xf32>
    %116 = arith.negf %115 : vector<8x128xf32>
    %117 = math.exp %116 : vector<8x128xf32>
    %cst_26 = arith.constant 1.000000e+00 : f32
    %118 = vector.broadcast %cst_26 : f32 to vector<8x128xf32>
    %119 = arith.addf %118, %117 : vector<8x128xf32>
    %120 = arith.divf %118, %119 : vector<8x128xf32>
    %121 = math.tanh %115 : vector<8x128xf32>
    %122 = vector.extract_strided_slice %120 {offsets = [0, 0], sizes = [8, 32], strides = [1, 1]} : vector<8x128xf32> to vector<8x32xf32>
    %123 = vector.extract_strided_slice %120 {offsets = [0, 32], sizes = [8, 32], strides = [1, 1]} : vector<8x128xf32> to vector<8x32xf32>
    %124 = vector.extract_strided_slice %121 {offsets = [0, 64], sizes = [8, 32], strides = [1, 1]} : vector<8x128xf32> to vector<8x32xf32>
    %125 = vector.extract_strided_slice %120 {offsets = [0, 96], sizes = [8, 32], strides = [1, 1]} : vector<8x128xf32> to vector<8x32xf32>
    %126 = arith.mulf %123, %89 : vector<8x32xf32>
    %127 = arith.mulf %122, %124 : vector<8x32xf32>
    %128 = arith.addf %126, %127 : vector<8x32xf32>
    %129 = math.tanh %128 : vector<8x32xf32>
    %130 = arith.mulf %125, %129 : vector<8x32xf32>
    %131 = vector.extract_strided_slice %6 {offsets = [24, 0], sizes = [8, 128], strides = [1, 1]} : vector<64x128xf32> to vector<8x128xf32>
    %132 = arith.truncf %110 : vector<8x32xf32> to vector<8x32xbf16>
    %cst_27 = arith.constant dense<0.000000e+00> : vector<8x128xf32>
    %133 = tpu.matmul %132, %7, %cst_27 {dimension_numbers = #tpu.dot_dimension_numbers<[1], [0], [0], [1], [0, 0, 1, 1], [], []>} : vector<8x32xbf16>, vector<32x128xbf16>, vector<8x128xf32> -> vector<8x128xf32>
    %134 = arith.addf %131, %133 : vector<8x128xf32>
    %135 = arith.negf %134 : vector<8x128xf32>
    %136 = math.exp %135 : vector<8x128xf32>
    %cst_28 = arith.constant 1.000000e+00 : f32
    %137 = vector.broadcast %cst_28 : f32 to vector<8x128xf32>
    %138 = arith.addf %137, %136 : vector<8x128xf32>
    %139 = arith.divf %137, %138 : vector<8x128xf32>
    %140 = math.tanh %134 : vector<8x128xf32>
    %141 = vector.extract_strided_slice %139 {offsets = [0, 0], sizes = [8, 32], strides = [1, 1]} : vector<8x128xf32> to vector<8x32xf32>
    %142 = vector.extract_strided_slice %139 {offsets = [0, 32], sizes = [8, 32], strides = [1, 1]} : vector<8x128xf32> to vector<8x32xf32>
    %143 = vector.extract_strided_slice %140 {offsets = [0, 64], sizes = [8, 32], strides = [1, 1]} : vector<8x128xf32> to vector<8x32xf32>
    %144 = vector.extract_strided_slice %139 {offsets = [0, 96], sizes = [8, 32], strides = [1, 1]} : vector<8x128xf32> to vector<8x32xf32>
    %145 = arith.mulf %142, %108 : vector<8x32xf32>
    %146 = arith.mulf %141, %143 : vector<8x32xf32>
    %147 = arith.addf %145, %146 : vector<8x32xf32>
    %148 = math.tanh %147 : vector<8x32xf32>
    %149 = arith.mulf %144, %148 : vector<8x32xf32>
    %150 = tpu.concatenate %149, %130 in 1 : vector<8x32xf32>, vector<8x32xf32> -> vector<8x64xf32>
    %151 = arith.truncf %150 : vector<8x64xf32> to vector<8x64xbf16>
    %cst_29 = arith.constant dense<0.000000e+00> : vector<8x128xf32>
    %152 = tpu.matmul %151, %8, %cst_29 {dimension_numbers = #tpu.dot_dimension_numbers<[1], [0], [0], [1], [0, 0, 1, 1], [], []>} : vector<8x64xbf16>, vector<64x128xbf16>, vector<8x128xf32> -> vector<8x128xf32>
    %153 = vector.broadcast %9 : vector<1x128xf32> to vector<8x128xf32>
    %154 = arith.addf %153, %152 : vector<8x128xf32>
    %155 = arith.negf %154 : vector<8x128xf32>
    %156 = math.exp %155 : vector<8x128xf32>
    %cst_30 = arith.constant 1.000000e+00 : f32
    %157 = vector.broadcast %cst_30 : f32 to vector<8x128xf32>
    %158 = arith.addf %157, %156 : vector<8x128xf32>
    %159 = arith.divf %157, %158 : vector<8x128xf32>
    %160 = math.tanh %154 : vector<8x128xf32>
    %161 = vector.extract_strided_slice %159 {offsets = [0, 0], sizes = [8, 32], strides = [1, 1]} : vector<8x128xf32> to vector<8x32xf32>
    %162 = vector.extract_strided_slice %159 {offsets = [0, 32], sizes = [8, 32], strides = [1, 1]} : vector<8x128xf32> to vector<8x32xf32>
    %163 = vector.extract_strided_slice %160 {offsets = [0, 64], sizes = [8, 32], strides = [1, 1]} : vector<8x128xf32> to vector<8x32xf32>
    %164 = vector.extract_strided_slice %159 {offsets = [0, 96], sizes = [8, 32], strides = [1, 1]} : vector<8x128xf32> to vector<8x32xf32>
    %165 = arith.mulf %162, %128 : vector<8x32xf32>
    %166 = arith.mulf %161, %163 : vector<8x32xf32>
    %167 = arith.addf %165, %166 : vector<8x32xf32>
    %168 = math.tanh %167 : vector<8x32xf32>
    %169 = arith.mulf %164, %168 : vector<8x32xf32>
    %170 = vector.extract_strided_slice %6 {offsets = [32, 0], sizes = [8, 128], strides = [1, 1]} : vector<64x128xf32> to vector<8x128xf32>
    %171 = arith.truncf %149 : vector<8x32xf32> to vector<8x32xbf16>
    %cst_31 = arith.constant dense<0.000000e+00> : vector<8x128xf32>
    %172 = tpu.matmul %171, %7, %cst_31 {dimension_numbers = #tpu.dot_dimension_numbers<[1], [0], [0], [1], [0, 0, 1, 1], [], []>} : vector<8x32xbf16>, vector<32x128xbf16>, vector<8x128xf32> -> vector<8x128xf32>
    %173 = arith.addf %170, %172 : vector<8x128xf32>
    %174 = arith.negf %173 : vector<8x128xf32>
    %175 = math.exp %174 : vector<8x128xf32>
    %cst_32 = arith.constant 1.000000e+00 : f32
    %176 = vector.broadcast %cst_32 : f32 to vector<8x128xf32>
    %177 = arith.addf %176, %175 : vector<8x128xf32>
    %178 = arith.divf %176, %177 : vector<8x128xf32>
    %179 = math.tanh %173 : vector<8x128xf32>
    %180 = vector.extract_strided_slice %178 {offsets = [0, 0], sizes = [8, 32], strides = [1, 1]} : vector<8x128xf32> to vector<8x32xf32>
    %181 = vector.extract_strided_slice %178 {offsets = [0, 32], sizes = [8, 32], strides = [1, 1]} : vector<8x128xf32> to vector<8x32xf32>
    %182 = vector.extract_strided_slice %179 {offsets = [0, 64], sizes = [8, 32], strides = [1, 1]} : vector<8x128xf32> to vector<8x32xf32>
    %183 = vector.extract_strided_slice %178 {offsets = [0, 96], sizes = [8, 32], strides = [1, 1]} : vector<8x128xf32> to vector<8x32xf32>
    %184 = arith.mulf %181, %147 : vector<8x32xf32>
    %185 = arith.mulf %180, %182 : vector<8x32xf32>
    %186 = arith.addf %184, %185 : vector<8x32xf32>
    %187 = math.tanh %186 : vector<8x32xf32>
    %188 = arith.mulf %183, %187 : vector<8x32xf32>
    %189 = tpu.concatenate %188, %169 in 1 : vector<8x32xf32>, vector<8x32xf32> -> vector<8x64xf32>
    %190 = arith.truncf %189 : vector<8x64xf32> to vector<8x64xbf16>
    %cst_33 = arith.constant dense<0.000000e+00> : vector<8x128xf32>
    %191 = tpu.matmul %190, %8, %cst_33 {dimension_numbers = #tpu.dot_dimension_numbers<[1], [0], [0], [1], [0, 0, 1, 1], [], []>} : vector<8x64xbf16>, vector<64x128xbf16>, vector<8x128xf32> -> vector<8x128xf32>
    %192 = vector.broadcast %9 : vector<1x128xf32> to vector<8x128xf32>
    %193 = arith.addf %192, %191 : vector<8x128xf32>
    %194 = arith.negf %193 : vector<8x128xf32>
    %195 = math.exp %194 : vector<8x128xf32>
    %cst_34 = arith.constant 1.000000e+00 : f32
    %196 = vector.broadcast %cst_34 : f32 to vector<8x128xf32>
    %197 = arith.addf %196, %195 : vector<8x128xf32>
    %198 = arith.divf %196, %197 : vector<8x128xf32>
    %199 = math.tanh %193 : vector<8x128xf32>
    %200 = vector.extract_strided_slice %198 {offsets = [0, 0], sizes = [8, 32], strides = [1, 1]} : vector<8x128xf32> to vector<8x32xf32>
    %201 = vector.extract_strided_slice %198 {offsets = [0, 32], sizes = [8, 32], strides = [1, 1]} : vector<8x128xf32> to vector<8x32xf32>
    %202 = vector.extract_strided_slice %199 {offsets = [0, 64], sizes = [8, 32], strides = [1, 1]} : vector<8x128xf32> to vector<8x32xf32>
    %203 = vector.extract_strided_slice %198 {offsets = [0, 96], sizes = [8, 32], strides = [1, 1]} : vector<8x128xf32> to vector<8x32xf32>
    %204 = arith.mulf %201, %167 : vector<8x32xf32>
    %205 = arith.mulf %200, %202 : vector<8x32xf32>
    %206 = arith.addf %204, %205 : vector<8x32xf32>
    %207 = math.tanh %206 : vector<8x32xf32>
    %208 = arith.mulf %203, %207 : vector<8x32xf32>
    %209 = vector.extract_strided_slice %6 {offsets = [40, 0], sizes = [8, 128], strides = [1, 1]} : vector<64x128xf32> to vector<8x128xf32>
    %210 = arith.truncf %188 : vector<8x32xf32> to vector<8x32xbf16>
    %cst_35 = arith.constant dense<0.000000e+00> : vector<8x128xf32>
    %211 = tpu.matmul %210, %7, %cst_35 {dimension_numbers = #tpu.dot_dimension_numbers<[1], [0], [0], [1], [0, 0, 1, 1], [], []>} : vector<8x32xbf16>, vector<32x128xbf16>, vector<8x128xf32> -> vector<8x128xf32>
    %212 = arith.addf %209, %211 : vector<8x128xf32>
    %213 = arith.negf %212 : vector<8x128xf32>
    %214 = math.exp %213 : vector<8x128xf32>
    %cst_36 = arith.constant 1.000000e+00 : f32
    %215 = vector.broadcast %cst_36 : f32 to vector<8x128xf32>
    %216 = arith.addf %215, %214 : vector<8x128xf32>
    %217 = arith.divf %215, %216 : vector<8x128xf32>
    %218 = math.tanh %212 : vector<8x128xf32>
    %219 = vector.extract_strided_slice %217 {offsets = [0, 0], sizes = [8, 32], strides = [1, 1]} : vector<8x128xf32> to vector<8x32xf32>
    %220 = vector.extract_strided_slice %217 {offsets = [0, 32], sizes = [8, 32], strides = [1, 1]} : vector<8x128xf32> to vector<8x32xf32>
    %221 = vector.extract_strided_slice %218 {offsets = [0, 64], sizes = [8, 32], strides = [1, 1]} : vector<8x128xf32> to vector<8x32xf32>
    %222 = vector.extract_strided_slice %217 {offsets = [0, 96], sizes = [8, 32], strides = [1, 1]} : vector<8x128xf32> to vector<8x32xf32>
    %223 = arith.mulf %220, %186 : vector<8x32xf32>
    %224 = arith.mulf %219, %221 : vector<8x32xf32>
    %225 = arith.addf %223, %224 : vector<8x32xf32>
    %226 = math.tanh %225 : vector<8x32xf32>
    %227 = arith.mulf %222, %226 : vector<8x32xf32>
    %228 = tpu.concatenate %227, %208 in 1 : vector<8x32xf32>, vector<8x32xf32> -> vector<8x64xf32>
    %229 = arith.truncf %228 : vector<8x64xf32> to vector<8x64xbf16>
    %cst_37 = arith.constant dense<0.000000e+00> : vector<8x128xf32>
    %230 = tpu.matmul %229, %8, %cst_37 {dimension_numbers = #tpu.dot_dimension_numbers<[1], [0], [0], [1], [0, 0, 1, 1], [], []>} : vector<8x64xbf16>, vector<64x128xbf16>, vector<8x128xf32> -> vector<8x128xf32>
    %231 = vector.broadcast %9 : vector<1x128xf32> to vector<8x128xf32>
    %232 = arith.addf %231, %230 : vector<8x128xf32>
    %233 = arith.negf %232 : vector<8x128xf32>
    %234 = math.exp %233 : vector<8x128xf32>
    %cst_38 = arith.constant 1.000000e+00 : f32
    %235 = vector.broadcast %cst_38 : f32 to vector<8x128xf32>
    %236 = arith.addf %235, %234 : vector<8x128xf32>
    %237 = arith.divf %235, %236 : vector<8x128xf32>
    %238 = math.tanh %232 : vector<8x128xf32>
    %239 = vector.extract_strided_slice %237 {offsets = [0, 0], sizes = [8, 32], strides = [1, 1]} : vector<8x128xf32> to vector<8x32xf32>
    %240 = vector.extract_strided_slice %237 {offsets = [0, 32], sizes = [8, 32], strides = [1, 1]} : vector<8x128xf32> to vector<8x32xf32>
    %241 = vector.extract_strided_slice %238 {offsets = [0, 64], sizes = [8, 32], strides = [1, 1]} : vector<8x128xf32> to vector<8x32xf32>
    %242 = vector.extract_strided_slice %237 {offsets = [0, 96], sizes = [8, 32], strides = [1, 1]} : vector<8x128xf32> to vector<8x32xf32>
    %243 = arith.mulf %240, %206 : vector<8x32xf32>
    %244 = arith.mulf %239, %241 : vector<8x32xf32>
    %245 = arith.addf %243, %244 : vector<8x32xf32>
    %246 = math.tanh %245 : vector<8x32xf32>
    %247 = arith.mulf %242, %246 : vector<8x32xf32>
    %248 = vector.extract_strided_slice %6 {offsets = [48, 0], sizes = [8, 128], strides = [1, 1]} : vector<64x128xf32> to vector<8x128xf32>
    %249 = arith.truncf %227 : vector<8x32xf32> to vector<8x32xbf16>
    %cst_39 = arith.constant dense<0.000000e+00> : vector<8x128xf32>
    %250 = tpu.matmul %249, %7, %cst_39 {dimension_numbers = #tpu.dot_dimension_numbers<[1], [0], [0], [1], [0, 0, 1, 1], [], []>} : vector<8x32xbf16>, vector<32x128xbf16>, vector<8x128xf32> -> vector<8x128xf32>
    %251 = arith.addf %248, %250 : vector<8x128xf32>
    %252 = arith.negf %251 : vector<8x128xf32>
    %253 = math.exp %252 : vector<8x128xf32>
    %cst_40 = arith.constant 1.000000e+00 : f32
    %254 = vector.broadcast %cst_40 : f32 to vector<8x128xf32>
    %255 = arith.addf %254, %253 : vector<8x128xf32>
    %256 = arith.divf %254, %255 : vector<8x128xf32>
    %257 = math.tanh %251 : vector<8x128xf32>
    %258 = vector.extract_strided_slice %256 {offsets = [0, 0], sizes = [8, 32], strides = [1, 1]} : vector<8x128xf32> to vector<8x32xf32>
    %259 = vector.extract_strided_slice %256 {offsets = [0, 32], sizes = [8, 32], strides = [1, 1]} : vector<8x128xf32> to vector<8x32xf32>
    %260 = vector.extract_strided_slice %257 {offsets = [0, 64], sizes = [8, 32], strides = [1, 1]} : vector<8x128xf32> to vector<8x32xf32>
    %261 = vector.extract_strided_slice %256 {offsets = [0, 96], sizes = [8, 32], strides = [1, 1]} : vector<8x128xf32> to vector<8x32xf32>
    %262 = arith.mulf %259, %225 : vector<8x32xf32>
    %263 = arith.mulf %258, %260 : vector<8x32xf32>
    %264 = arith.addf %262, %263 : vector<8x32xf32>
    %265 = math.tanh %264 : vector<8x32xf32>
    %266 = arith.mulf %261, %265 : vector<8x32xf32>
    %267 = tpu.concatenate %266, %247 in 1 : vector<8x32xf32>, vector<8x32xf32> -> vector<8x64xf32>
    %268 = arith.truncf %267 : vector<8x64xf32> to vector<8x64xbf16>
    %cst_41 = arith.constant dense<0.000000e+00> : vector<8x128xf32>
    %269 = tpu.matmul %268, %8, %cst_41 {dimension_numbers = #tpu.dot_dimension_numbers<[1], [0], [0], [1], [0, 0, 1, 1], [], []>} : vector<8x64xbf16>, vector<64x128xbf16>, vector<8x128xf32> -> vector<8x128xf32>
    %270 = vector.broadcast %9 : vector<1x128xf32> to vector<8x128xf32>
    %271 = arith.addf %270, %269 : vector<8x128xf32>
    %272 = arith.negf %271 : vector<8x128xf32>
    %273 = math.exp %272 : vector<8x128xf32>
    %cst_42 = arith.constant 1.000000e+00 : f32
    %274 = vector.broadcast %cst_42 : f32 to vector<8x128xf32>
    %275 = arith.addf %274, %273 : vector<8x128xf32>
    %276 = arith.divf %274, %275 : vector<8x128xf32>
    %277 = math.tanh %271 : vector<8x128xf32>
    %278 = vector.extract_strided_slice %276 {offsets = [0, 0], sizes = [8, 32], strides = [1, 1]} : vector<8x128xf32> to vector<8x32xf32>
    %279 = vector.extract_strided_slice %276 {offsets = [0, 32], sizes = [8, 32], strides = [1, 1]} : vector<8x128xf32> to vector<8x32xf32>
    %280 = vector.extract_strided_slice %277 {offsets = [0, 64], sizes = [8, 32], strides = [1, 1]} : vector<8x128xf32> to vector<8x32xf32>
    %281 = vector.extract_strided_slice %276 {offsets = [0, 96], sizes = [8, 32], strides = [1, 1]} : vector<8x128xf32> to vector<8x32xf32>
    %282 = arith.mulf %279, %245 : vector<8x32xf32>
    %283 = arith.mulf %278, %280 : vector<8x32xf32>
    %284 = arith.addf %282, %283 : vector<8x32xf32>
    %285 = math.tanh %284 : vector<8x32xf32>
    %286 = arith.mulf %281, %285 : vector<8x32xf32>
    %287 = vector.extract_strided_slice %6 {offsets = [56, 0], sizes = [8, 128], strides = [1, 1]} : vector<64x128xf32> to vector<8x128xf32>
    %288 = arith.truncf %266 : vector<8x32xf32> to vector<8x32xbf16>
    %cst_43 = arith.constant dense<0.000000e+00> : vector<8x128xf32>
    %289 = tpu.matmul %288, %7, %cst_43 {dimension_numbers = #tpu.dot_dimension_numbers<[1], [0], [0], [1], [0, 0, 1, 1], [], []>} : vector<8x32xbf16>, vector<32x128xbf16>, vector<8x128xf32> -> vector<8x128xf32>
    %290 = arith.addf %287, %289 : vector<8x128xf32>
    %291 = arith.negf %290 : vector<8x128xf32>
    %292 = math.exp %291 : vector<8x128xf32>
    %cst_44 = arith.constant 1.000000e+00 : f32
    %293 = vector.broadcast %cst_44 : f32 to vector<8x128xf32>
    %294 = arith.addf %293, %292 : vector<8x128xf32>
    %295 = arith.divf %293, %294 : vector<8x128xf32>
    %296 = math.tanh %290 : vector<8x128xf32>
    %297 = vector.extract_strided_slice %295 {offsets = [0, 0], sizes = [8, 32], strides = [1, 1]} : vector<8x128xf32> to vector<8x32xf32>
    %298 = vector.extract_strided_slice %295 {offsets = [0, 32], sizes = [8, 32], strides = [1, 1]} : vector<8x128xf32> to vector<8x32xf32>
    %299 = vector.extract_strided_slice %296 {offsets = [0, 64], sizes = [8, 32], strides = [1, 1]} : vector<8x128xf32> to vector<8x32xf32>
    %300 = vector.extract_strided_slice %295 {offsets = [0, 96], sizes = [8, 32], strides = [1, 1]} : vector<8x128xf32> to vector<8x32xf32>
    %301 = arith.mulf %298, %264 : vector<8x32xf32>
    %302 = arith.mulf %297, %299 : vector<8x32xf32>
    %303 = arith.addf %301, %302 : vector<8x32xf32>
    %304 = math.tanh %303 : vector<8x32xf32>
    %305 = arith.mulf %300, %304 : vector<8x32xf32>
    %306 = tpu.concatenate %305, %286 in 1 : vector<8x32xf32>, vector<8x32xf32> -> vector<8x64xf32>
    %307 = arith.truncf %306 : vector<8x64xf32> to vector<8x64xbf16>
    %cst_45 = arith.constant dense<0.000000e+00> : vector<8x128xf32>
    %308 = tpu.matmul %307, %8, %cst_45 {dimension_numbers = #tpu.dot_dimension_numbers<[1], [0], [0], [1], [0, 0, 1, 1], [], []>} : vector<8x64xbf16>, vector<64x128xbf16>, vector<8x128xf32> -> vector<8x128xf32>
    %309 = vector.broadcast %9 : vector<1x128xf32> to vector<8x128xf32>
    %310 = arith.addf %309, %308 : vector<8x128xf32>
    %311 = arith.negf %310 : vector<8x128xf32>
    %312 = math.exp %311 : vector<8x128xf32>
    %cst_46 = arith.constant 1.000000e+00 : f32
    %313 = vector.broadcast %cst_46 : f32 to vector<8x128xf32>
    %314 = arith.addf %313, %312 : vector<8x128xf32>
    %315 = arith.divf %313, %314 : vector<8x128xf32>
    %316 = math.tanh %310 : vector<8x128xf32>
    %317 = vector.extract_strided_slice %315 {offsets = [0, 0], sizes = [8, 32], strides = [1, 1]} : vector<8x128xf32> to vector<8x32xf32>
    %318 = vector.extract_strided_slice %315 {offsets = [0, 32], sizes = [8, 32], strides = [1, 1]} : vector<8x128xf32> to vector<8x32xf32>
    %319 = vector.extract_strided_slice %316 {offsets = [0, 64], sizes = [8, 32], strides = [1, 1]} : vector<8x128xf32> to vector<8x32xf32>
    %320 = vector.extract_strided_slice %315 {offsets = [0, 96], sizes = [8, 32], strides = [1, 1]} : vector<8x128xf32> to vector<8x32xf32>
    %321 = arith.mulf %318, %284 : vector<8x32xf32>
    %322 = arith.mulf %317, %319 : vector<8x32xf32>
    %323 = arith.addf %321, %322 : vector<8x32xf32>
    %324 = math.tanh %323 : vector<8x32xf32>
    %325 = arith.mulf %320, %324 : vector<8x32xf32>
    %c0_47 = arith.constant 0 : index
    %c0_48 = arith.constant 0 : index
    %326 = vector.load %arg6[%c0_47, %c0_48] : memref<1x32xf32, #tpu.memory_space<vmem>>, vector<1x32xf32>
    %327 = vector.broadcast %326 : vector<1x32xf32> to vector<8x32xf32>
    %328 = arith.mulf %325, %327 : vector<8x32xf32>
    %cst_49 = arith.constant dense<0.000000e+00> : vector<8xf32>
    %329 = vector.multi_reduction <add>, %328, %cst_49 [1] : vector<8x32xf32> to vector<8xf32>
    %330 = vector.shape_cast %329 : vector<8xf32> to vector<8x1xf32>
    %c0_50 = arith.constant 0 : index
    %c0_51 = arith.constant 0 : index
    %331 = vector.load %arg7[%c0_50, %c0_51] : memref<1x1xf32, #tpu.memory_space<vmem>>, vector<1x1xf32>
    %332 = vector.broadcast %331 : vector<1x1xf32> to vector<8x1xf32>
    %333 = arith.addf %330, %332 : vector<8x1xf32>
    %334 = vector.shape_cast %333 : vector<8x1xf32> to vector<8x1xf32>
    %335 = vector.broadcast %334 : vector<8x1xf32> to vector<8x128xf32>
    %c0_52 = arith.constant 0 : index
    %c0_53 = arith.constant 0 : index
    %336 = vector.load %arg8[%c0_52, %c0_53] : memref<8x128xf32, #tpu.memory_space<vmem>>, vector<8x128xf32>
    tpu.vector_store %arg8[%c0_52, %c0_53], %335 {strides = array<i32>} : memref<8x128xf32, #tpu.memory_space<vmem>>, vector<8x128xf32>,
    return
  }
}

</mosaic_0001>

<llo_original>
// kernel: multivariate_lstm_forward.1
$region0: #{multivariate_lstm_forward.1}
  #allocation0 [shape = 'u32[]', space=smem, size = 0x4, offset = 0x4, fixed_abs, tag = 'smem constant byte address 0x4 - core index']
  #allocation1 [shape = 'u32[144,128]{1,0:T(1,128)}', space=vmem, size = 0x12000, scoped, tag = 'internal scratch']
  #allocation2 [shape = 'f32[1,1]{1,0:T(1,128)S(1)}', space=vmem, size = 0x200, scoped, tag = 'scoped memory for multivariate_lstm_forward.1']
  %s0 = inlined_call_operand.vmem [shape: f32[64,4], index: 0, kind: input, shape index: {}]
  %s1 = inlined_call_operand.vmem [shape: bf16[4,128], index: 1, kind: input, shape index: {}]
  %s2 = inlined_call_operand.vmem [shape: bf16[32,128], index: 2, kind: input, shape index: {}]
  %s3 = inlined_call_operand.vmem [shape: f32[1,128], index: 3, kind: input, shape index: {}]
  %s4 = inlined_call_operand.vmem [shape: bf16[64,128], index: 4, kind: input, shape index: {}]
  %s5 = inlined_call_operand.vmem [shape: f32[1,128], index: 5, kind: input, shape index: {}]
  %s6 = inlined_call_operand.vmem [shape: f32[1,32], index: 6, kind: input, shape index: {}]
  %s7 = inlined_call_operand.<no memory space> [shape: f32[1,1], index: 7, kind: input, shape index: {}]
  %s8 = inlined_call_operand.vmem [shape: f32[8,128], index: 8, kind: output, shape index: {}]
  %s9 = sld [smem:[#allocation0]]
  $region42: #{multivariate_lstm_forward.1} parent=0
    _
  %s11 = ssub.s32 1, %s9
  %s12 = scalar_select 0, %s11, %s9
  %v13 = vstv %s7
  %14 = vst [vmem:[#allocation2] sm:$0x1] %v13
  // Predicated region
  $region2: #{multivariate_lstm_forward.1} parent=0 // pred_check
    _
  $region3: #{multivariate_lstm_forward.1} parent=0 // pred_check_branch
    %16 = sbr.rel (0) target = $region5
  $region4: #{multivariate_lstm_forward.1} parent=0 // pred_region
    _
  $region5: #{multivariate_lstm_forward.1} parent=0 // pred_fallthru
    _
  // Predicated region
  $region6: #{multivariate_lstm_forward.1} parent=0 // pred_check
    _
  $region7: #{multivariate_lstm_forward.1} parent=0 // pred_check_branch
    %18 = sbr.rel (0) target = $region9
  $region8: #{multivariate_lstm_forward.1} parent=0 // pred_region
    _
  $region9: #{multivariate_lstm_forward.1} parent=0 // pred_fallthru
    _
  // Predicated region
  $region10: #{multivariate_lstm_forward.1} parent=0 // pred_check
    _
  $region11: #{multivariate_lstm_forward.1} parent=0 // pred_check_branch
    %20 = sbr.rel (0) target = $region13
  $region12: #{multivariate_lstm_forward.1} parent=0 // pred_region
    _
  $region13: #{multivariate_lstm_forward.1} parent=0 // pred_fallthru
    _
  // Predicated region
  $region14: #{multivariate_lstm_forward.1} parent=0 // pred_check
    _
  $region15: #{multivariate_lstm_forward.1} parent=0 // pred_check_branch
    %22 = sbr.rel (0) target = $region17
  $region16: #{multivariate_lstm_forward.1} parent=0 // pred_region
    _
  $region17: #{multivariate_lstm_forward.1} parent=0 // pred_fallthru
    _
  // Predicated region
  $region18: #{multivariate_lstm_forward.1} parent=0 // pred_check
    _
  $region19: #{multivariate_lstm_forward.1} parent=0 // pred_check_branch
    %24 = sbr.rel (0) target = $region21
  $region20: #{multivariate_lstm_forward.1} parent=0 // pred_region
    _
  $region21: #{multivariate_lstm_forward.1} parent=0 // pred_fallthru
    _
  // Predicated region
  $region22: #{multivariate_lstm_forward.1} parent=0 // pred_check
    _
  $region23: #{multivariate_lstm_forward.1} parent=0 // pred_check_branch
    %26 = sbr.rel (0) target = $region25
  $region24: #{multivariate_lstm_forward.1} parent=0 // pred_region
    _
  $region25: #{multivariate_lstm_forward.1} parent=0 // pred_fallthru
    _
  // Predicated region
  $region26: #{multivariate_lstm_forward.1} parent=0 // pred_check
    _
  $region27: #{multivariate_lstm_forward.1} parent=0 // pred_check_branch
    %28 = sbr.rel (0) target = $region29
  $region28: #{multivariate_lstm_forward.1} parent=0 // pred_region
    _
  $region29: #{multivariate_lstm_forward.1} parent=0 // pred_fallthru
    _
  // Predicated region
  $region30: #{multivariate_lstm_forward.1} parent=0 // pred_check
    _
  $region31: #{multivariate_lstm_forward.1} parent=0 // pred_check_branch
    %30 = sbr.rel (0) target = $region33
  $region32: #{multivariate_lstm_forward.1} parent=0 // pred_region
    _
  $region33: #{multivariate_lstm_forward.1} parent=0 // pred_fallthru
    _
  %v32 = vld [vmem:[%s0] sm:$0xff]
  %v33 = vld [vmem:[%s0 + $0x8] sm:$0xff]
  %v34 = vld [vmem:[%s0 + $0x10] sm:$0xff]
  %v35 = vld [vmem:[%s0 + $0x18] sm:$0xff]
  %v36 = vld [vmem:[%s0 + $0x20] sm:$0xff]
  %v37 = vld [vmem:[%s0 + $0x28] sm:$0xff]
  %v38 = vld [vmem:[%s0 + $0x30] sm:$0xff]
  %v39 = vld [vmem:[%s0 + $0x38] sm:$0xff]
  %v40 = vpack.c.bf16 %v33, %v32
  %v41 = vpack.c.bf16 %v35, %v34
  %v42 = vpack.c.bf16 %v37, %v36
  %v43 = vpack.c.bf16 %v39, %v38
  %v44 = vld [vmem:[%s1] sm:$0x3]
  %v45 = vld [vmem:[%s3] sm:$0x1]
  %v47 = vlaneseq
  %v48 = vshrl.u32 %v47, 7
  %v49 = vsub.s32 0, %v48
  %v50 = vrot.slane %v45, %v49
  %vm52 = vcmask 31744
  %v54 = vsel %vm52, %v40, 0
  %v57 = vsel %vm52, %v41, 0
  %v60 = vsel %vm52, %v42, 0
  %v63 = vsel %vm52, %v43, 0
  %vm65 = vcmask 1041408
  %v67 = vsel %vm65, %v44, 0
  %69 = vmatprep.subr.bf16.mxu0 0
  %70 = vmatpush1.bf16.msra.mxu0 0
  %71 = vmatprep.subr.bf16.mxu0 0
  %72 = vmatpush1.bf16.msra.mxu0 0
  %73 = vmatprep.subr.bf16.mxu0 0
  %74 = vmatpush1.bf16.msra.mxu0 0
  %75 = vmatprep.subr.bf16.mxu0 0
  %76 = vmatpush1.bf16.msra.mxu0 0
  %77 = vmatprep.subr.bf16.mxu0 0
  %78 = vmatpush1.bf16.msra.mxu0 0
  %79 = vmatprep.subr.bf16.mxu0 0
  %80 = vmatpush1.bf16.msra.mxu0 0
  %81 = vmatprep.subr.bf16.mxu0 0
  %82 = vmatpush1.bf16.msra.mxu0 0
  %83 = vmatprep.subr.bf16.mxu0 0
  %84 = vmatpush1.bf16.msra.mxu0 %v67
  %85 = vmatprep.subr.bf16.mxu0 0
  %86 = vmatpush2.bf16.msra.mxu0 0
  %87 = vmatprep.subr.bf16.mxu0 0
  %88 = vmatpush2.bf16.msra.mxu0 0
  %89 = vmatprep.subr.bf16.mxu0 0
  %90 = vmatpush2.bf16.msra.mxu0 0
  %91 = vmatprep.subr.bf16.mxu0 0
  %92 = vmatpush2.bf16.msra.mxu0 0
  %93 = vmatprep.subr.bf16.mxu0 0
  %94 = vmatpush2.bf16.msra.mxu0 0
  %95 = vmatprep.subr.bf16.mxu0 0
  %96 = vmatpush2.bf16.msra.mxu0 0
  %97 = vmatprep.subr.bf16.mxu0 0
  %98 = vmatpush2.bf16.msra.mxu0 0
  %99 = vmatprep.subr.bf16.mxu0 0
  %100 = vmatpush2.bf16.msra.mxu0 0
  %101 = vmatprep.mubr.bf16.mxu0 0
  %102 = vmatmul.mubr.bf16.gmra.mxu0 %v54
  %v103 = vpop.f32.mrf.mxu0
  %v104 = vadd.f32 %v50, %v103
  %v105 = vpop.f32.mrf.mxu0
  %v106 = vpop.f32.mrf.mxu0
  %v107 = vadd.f32 %v50, %v106
  %v108 = vpop.f32.mrf.mxu0
  %109 = vmatprep.mubr.bf16.mxu0 0
  %110 = vmatmul.mubr.bf16.gmra.mxu0 %v57
  %v111 = vpop.f32.mrf.mxu0
  %v112 = vadd.f32 %v50, %v111
  %v113 = vpop.f32.mrf.mxu0
  %v114 = vpop.f32.mrf.mxu0
  %v115 = vadd.f32 %v50, %v114
  %v116 = vpop.f32.mrf.mxu0
  %117 = vmatprep.mubr.bf16.mxu0 0
  %118 = vmatmul.mubr.bf16.gmra.mxu0 %v60
  %v119 = vpop.f32.mrf.mxu0
  %v120 = vadd.f32 %v50, %v119
  %v121 = vpop.f32.mrf.mxu0
  %v122 = vpop.f32.mrf.mxu0
  %v123 = vadd.f32 %v50, %v122
  %v124 = vpop.f32.mrf.mxu0
  %125 = vmatprep.mubr.bf16.mxu0 0
  %126 = vmatmul.mubr.bf16.gmra.mxu0 %v63
  %v127 = vpop.f32.mrf.mxu0
  %v128 = vadd.f32 %v50, %v127
  %v129 = vpop.f32.mrf.mxu0
  %v130 = vpop.f32.mrf.mxu0
  %v131 = vadd.f32 %v50, %v130
  %v132 = vpop.f32.mrf.mxu0
  %133 = vdwg.mxu0
  %v134 = vld [vmem:[%s2] sm:$0xf]
  %v135 = vld [vmem:[%s2 + $0x4] sm:$0xf]
  %v136 = vld [vmem:[%s2 + $0x8] sm:$0xf]
  %v137 = vld [vmem:[%s2 + $0xc] sm:$0xf]
  %v138 = vld [vmem:[%s4] sm:$0xf]
  %v139 = vld [vmem:[%s4 + $0x4] sm:$0xf]
  %v140 = vld [vmem:[%s4 + $0x8] sm:$0xf]
  %v141 = vld [vmem:[%s4 + $0xc] sm:$0xf]
  %v142 = vld [vmem:[%s4 + $0x10] sm:$0xf]
  %v143 = vld [vmem:[%s4 + $0x14] sm:$0xf]
  %v144 = vld [vmem:[%s4 + $0x18] sm:$0xf]
  %v145 = vld [vmem:[%s4 + $0x1c] sm:$0xf]
  %v146 = vld [vmem:[%s5] sm:$0x1]
  %v151 = vunpack.c.l.b16 %v134
  %v152 = vunpack.c.l.b16 %v135
  %v153 = vunpack.c.l.b16 %v136
  %v154 = vunpack.c.l.b16 %v137
  %v155 = vpack.c.b16 %v152, %v151
  %v156 = vpack.c.b16 %v154, %v153
  %vm159 = vcmask 261120
  %v161 = vsel %vm159, 0, 0
  %163 = vmatprep.subr.bf16.mxu0 0
  %164 = vmatpush1.bf16.msra.mxu0 0
  %165 = vmatprep.subr.bf16.mxu0 0
  %166 = vmatpush1.bf16.msra.mxu0 0
  %167 = vmatprep.subr.bf16.mxu0 0
  %168 = vmatpush1.bf16.msra.mxu0 0
  %169 = vmatprep.subr.bf16.mxu0 0
  %170 = vmatpush1.bf16.msra.mxu0 0
  %171 = vmatprep.subr.bf16.mxu0 0
  %172 = vmatpush1.bf16.msra.mxu0 0
  %173 = vmatprep.subr.bf16.mxu0 0
  %174 = vmatpush1.bf16.msra.mxu0 0
  %175 = vmatprep.subr.bf16.mxu0 0
  %176 = vmatpush1.bf16.msra.mxu0 %v156
  %177 = vmatprep.subr.bf16.mxu0 0
  %178 = vmatpush1.bf16.msra.mxu0 %v155
  %179 = vmatprep.subr.bf16.mxu0 0
  %180 = vmatpush2.bf16.msra.mxu0 0
  %181 = vmatprep.subr.bf16.mxu0 0
  %182 = vmatpush2.bf16.msra.mxu0 0
  %183 = vmatprep.subr.bf16.mxu0 0
  %184 = vmatpush2.bf16.msra.mxu0 0
  %185 = vmatprep.subr.bf16.mxu0 0
  %186 = vmatpush2.bf16.msra.mxu0 0
  %187 = vmatprep.subr.bf16.mxu0 0
  %188 = vmatpush2.bf16.msra.mxu0 0
  %189 = vmatprep.subr.bf16.mxu0 0
  %190 = vmatpush2.bf16.msra.mxu0 0
  %191 = vmatprep.subr.bf16.mxu0 0
  %192 = vmatpush2.bf16.msra.mxu0 0
  %193 = vmatprep.subr.bf16.mxu0 0
  %194 = vmatpush2.bf16.msra.mxu0 0
  %195 = vmatprep.mubr.bf16.mxu0 0
  %196 = vmatmul.mubr.bf16.gmra.mxu0 %v161
  %v197 = vpop.f32.mrf.mxu0
  %v198 = vadd.f32 0.0, %v197
  %v199 = vpop.f32.mrf.mxu0
  %v200 = vpop.f32.mrf.mxu0
  %v201 = vpop.f32.mrf.mxu0
  %202 = vdwg.mxu0
  %v203 = vadd.f32 %v104, %v198
  %v204 = vxor.u32 %v203, 2147483648
  %v205 = vmul.f32 %v204, 1.442695
  %v206 = vpow.pop %v205
  %v207 = vadd.f32 %v206, 1.0
  %v208 = vrcp.pop %v207
  %v209 = vmul.f32 1.0, %v208
  %v210 = vtanh.pop %v203
  %v211 = vmul.f32 %v209, 0.0
  %213 = vrot.lane.b32.xlu0 %v210, 64
  %v214 = vpop.permute.xlu0 %213
  %v216 = vmul.f32 %v209, %v214
  %218 = vrot.lane.b32.xlu0 %v216, 32
  %v219 = vpop.permute.xlu0 %218
  %v221 = vadd.f32 %v211, %v219
  %v222 = vtanh.pop %v221
  %224 = vrot.lane.b32.xlu0 %v222, 64
  %v225 = vpop.permute.xlu0 %224
  %v227 = vmul.f32 %v209, %v225
  %229 = vrot.lane.b32.xlu0 %v227, 32
  %v230 = vpop.permute.xlu0 %229
  %v232 = vsel %vm159, %v230, 0.0
  %v233 = vpack.c.bf16 %v232, %v232
  %v242 = vunpack.c.l.b16 %v138
  %v243 = vunpack.c.l.b16 %v139
  %v244 = vunpack.c.l.b16 %v140
  %v245 = vunpack.c.l.b16 %v141
  %v246 = vunpack.c.l.b16 %v142
  %v247 = vunpack.c.l.b16 %v143
  %v248 = vunpack.c.l.b16 %v144
  %v249 = vunpack.c.l.b16 %v145
  %v250 = vpack.c.b16 %v243, %v242
  %v251 = vpack.c.b16 %v245, %v244
  %v252 = vpack.c.b16 %v247, %v246
  %v253 = vpack.c.b16 %v249, %v248
  %vm258 = vcmask 523264
  %v260 = vsel %vm258, %v233, 0
  %262 = vmatprep.subr.bf16.mxu0 0
  %263 = vmatpush1.bf16.msra.mxu0 0
  %264 = vmatprep.subr.bf16.mxu0 0
  %265 = vmatpush1.bf16.msra.mxu0 0
  %266 = vmatprep.subr.bf16.mxu0 0
  %267 = vmatpush1.bf16.msra.mxu0 0
  %268 = vmatprep.subr.bf16.mxu0 0
  %269 = vmatpush1.bf16.msra.mxu0 0
  %270 = vmatprep.subr.bf16.mxu0 0
  %271 = vmatpush1.bf16.msra.mxu0 %v253
  %272 = vmatprep.subr.bf16.mxu0 0
  %273 = vmatpush1.bf16.msra.mxu0 %v252
  %274 = vmatprep.subr.bf16.mxu0 0
  %275 = vmatpush1.bf16.msra.mxu0 %v251
  %276 = vmatprep.subr.bf16.mxu0 0
  %277 = vmatpush1.bf16.msra.mxu0 %v250
  %278 = vmatprep.subr.bf16.mxu0 0
  %279 = vmatpush2.bf16.msra.mxu0 0
  %280 = vmatprep.subr.bf16.mxu0 0
  %281 = vmatpush2.bf16.msra.mxu0 0
  %282 = vmatprep.subr.bf16.mxu0 0
  %283 = vmatpush2.bf16.msra.mxu0 0
  %284 = vmatprep.subr.bf16.mxu0 0
  %285 = vmatpush2.bf16.msra.mxu0 0
  %286 = vmatprep.subr.bf16.mxu0 0
  %287 = vmatpush2.bf16.msra.mxu0 0
  %288 = vmatprep.subr.bf16.mxu0 0
  %289 = vmatpush2.bf16.msra.mxu0 0
  %290 = vmatprep.subr.bf16.mxu0 0
  %291 = vmatpush2.bf16.msra.mxu0 0
  %292 = vmatprep.subr.bf16.mxu0 0
  %293 = vmatpush2.bf16.msra.mxu0 0
  %294 = vmatprep.mubr.bf16.mxu0 0
  %295 = vmatmul.mubr.bf16.gmra.mxu0 %v260
  %v296 = vpop.f32.mrf.mxu0
  %v297 = vadd.f32 0.0, %v296
  %v298 = vpop.f32.mrf.mxu0
  %v299 = vpop.f32.mrf.mxu0
  %v300 = vpop.f32.mrf.mxu0
  %301 = vdwg.mxu0
  %v303 = vlaneseq
  %v304 = vshrl.u32 %v303, 7
  %v305 = vsub.s32 0, %v304
  %v306 = vrot.slane %v146, %v305
  %v308 = vadd.f32 %v306, %v297
  %v309 = vxor.u32 %v308, 2147483648
  %v310 = vmul.f32 %v309, 1.442695
  %v311 = vpow.pop %v310
  %v312 = vadd.f32 %v311, 1.0
  %v313 = vrcp.pop %v312
  %v314 = vmul.f32 1.0, %v313
  %v315 = vtanh.pop %v308
  %v316 = vmul.f32 %v314, 0.0
  %318 = vrot.lane.b32.xlu0 %v315, 64
  %v319 = vpop.permute.xlu0 %318
  %v321 = vmul.f32 %v314, %v319
  %323 = vrot.lane.b32.xlu0 %v321, 32
  %v324 = vpop.permute.xlu0 %323
  %v326 = vadd.f32 %v316, %v324
  %v327 = vtanh.pop %v326
  %329 = vrot.lane.b32.xlu0 %v327, 64
  %v330 = vpop.permute.xlu0 %329
  %v332 = vmul.f32 %v314, %v330
  %v333 = vpack.c.bf16 %v227, %v227
  %335 = vrot.lane.b32.xlu0 %v333, 32
  %v336 = vpop.permute.xlu0 %335
  %v338 = vsel %vm159, %v336, 0
  %340 = vmatprep.subr.bf16.mxu0 0
  %341 = vmatpush1.bf16.msra.mxu0 0
  %342 = vmatprep.subr.bf16.mxu0 0
  %343 = vmatpush1.bf16.msra.mxu0 0
  %344 = vmatprep.subr.bf16.mxu0 0
  %345 = vmatpush1.bf16.msra.mxu0 0
  %346 = vmatprep.subr.bf16.mxu0 0
  %347 = vmatpush1.bf16.msra.mxu0 0
  %348 = vmatprep.subr.bf16.mxu0 0
  %349 = vmatpush1.bf16.msra.mxu0 0
  %350 = vmatprep.subr.bf16.mxu0 0
  %351 = vmatpush1.bf16.msra.mxu0 0
  %352 = vmatprep.subr.bf16.mxu0 0
  %353 = vmatpush1.bf16.msra.mxu0 %v156
  %354 = vmatprep.subr.bf16.mxu0 0
  %355 = vmatpush1.bf16.msra.mxu0 %v155
  %356 = vmatprep.subr.bf16.mxu0 0
  %357 = vmatpush2.bf16.msra.mxu0 0
  %358 = vmatprep.subr.bf16.mxu0 0
  %359 = vmatpush2.bf16.msra.mxu0 0
  %360 = vmatprep.subr.bf16.mxu0 0
  %361 = vmatpush2.bf16.msra.mxu0 0
  %362 = vmatprep.subr.bf16.mxu0 0
  %363 = vmatpush2.bf16.msra.mxu0 0
  %364 = vmatprep.subr.bf16.mxu0 0
  %365 = vmatpush2.bf16.msra.mxu0 0
  %366 = vmatprep.subr.bf16.mxu0 0
  %367 = vmatpush2.bf16.msra.mxu0 0
  %368 = vmatprep.subr.bf16.mxu0 0
  %369 = vmatpush2.bf16.msra.mxu0 0
  %370 = vmatprep.subr.bf16.mxu0 0
  %371 = vmatpush2.bf16.msra.mxu0 0
  %372 = vmatprep.mubr.bf16.mxu0 0
  %373 = vmatmul.mubr.bf16.gmra.mxu0 %v338
  %v374 = vpop.f32.mrf.mxu0
  %v375 = vadd.f32 0.0, %v374
  %v376 = vpop.f32.mrf.mxu0
  %v377 = vpop.f32.mrf.mxu0
  %v378 = vpop.f32.mrf.mxu0
  %379 = vdwg.mxu0
  %v380 = vadd.f32 %v107, %v375
  %v381 = vxor.u32 %v380, 2147483648
  %v382 = vmul.f32 %v381, 1.442695
  %v383 = vpow.pop %v382
  %v384 = vadd.f32 %v383, 1.0
  %v385 = vrcp.pop %v384
  %v386 = vmul.f32 1.0, %v385
  %v387 = vtanh.pop %v380
  %v388 = vmul.f32 %v386, %v221
  %390 = vrot.lane.b32.xlu0 %v387, 64
  %v391 = vpop.permute.xlu0 %390
  %v393 = vmul.f32 %v386, %v391
  %395 = vrot.lane.b32.xlu0 %v393, 32
  %v396 = vpop.permute.xlu0 %395
  %v398 = vadd.f32 %v388, %v396
  %v399 = vtanh.pop %v398
  %401 = vrot.lane.b32.xlu0 %v399, 64
  %v402 = vpop.permute.xlu0 %401
  %v404 = vmul.f32 %v386, %v402
  %406 = vrot.lane.b32.xlu0 %v404, 32
  %v407 = vpop.permute.xlu0 %406
  %410 = vrot.lane.b32.xlu0 %v332, 64
  %v411 = vpop.permute.xlu0 %410
  %v413 = vsel %vm159, %v407, %v411
  %v414 = vpack.c.bf16 %v413, %v413
  %v416 = vsel %vm258, %v414, 0
  %418 = vmatprep.subr.bf16.mxu0 0
  %419 = vmatpush1.bf16.msra.mxu0 0
  %420 = vmatprep.subr.bf16.mxu0 0
  %421 = vmatpush1.bf16.msra.mxu0 0
  %422 = vmatprep.subr.bf16.mxu0 0
  %423 = vmatpush1.bf16.msra.mxu0 0
  %424 = vmatprep.subr.bf16.mxu0 0
  %425 = vmatpush1.bf16.msra.mxu0 0
  %426 = vmatprep.subr.bf16.mxu0 0
  %427 = vmatpush1.bf16.msra.mxu0 %v253
  %428 = vmatprep.subr.bf16.mxu0 0
  %429 = vmatpush1.bf16.msra.mxu0 %v252
  %430 = vmatprep.subr.bf16.mxu0 0
  %431 = vmatpush1.bf16.msra.mxu0 %v251
  %432 = vmatprep.subr.bf16.mxu0 0
  %433 = vmatpush1.bf16.msra.mxu0 %v250
  %434 = vmatprep.subr.bf16.mxu0 0
  %435 = vmatpush2.bf16.msra.mxu0 0
  %436 = vmatprep.subr.bf16.mxu0 0
  %437 = vmatpush2.bf16.msra.mxu0 0
  %438 = vmatprep.subr.bf16.mxu0 0
  %439 = vmatpush2.bf16.msra.mxu0 0
  %440 = vmatprep.subr.bf16.mxu0 0
  %441 = vmatpush2.bf16.msra.mxu0 0
  %442 = vmatprep.subr.bf16.mxu0 0
  %443 = vmatpush2.bf16.msra.mxu0 0
  %444 = vmatprep.subr.bf16.mxu0 0
  %445 = vmatpush2.bf16.msra.mxu0 0
  %446 = vmatprep.subr.bf16.mxu0 0
  %447 = vmatpush2.bf16.msra.mxu0 0
  %448 = vmatprep.subr.bf16.mxu0 0
  %449 = vmatpush2.bf16.msra.mxu0 0
  %450 = vmatprep.mubr.bf16.mxu0 0
  %451 = vmatmul.mubr.bf16.gmra.mxu0 %v416
  %v452 = vpop.f32.mrf.mxu0
  %v453 = vadd.f32 0.0, %v452
  %v454 = vpop.f32.mrf.mxu0
  %v455 = vpop.f32.mrf.mxu0
  %v456 = vpop.f32.mrf.mxu0
  %457 = vdwg.mxu0
  %v458 = vadd.f32 %v306, %v453
  %v459 = vxor.u32 %v458, 2147483648
  %v460 = vmul.f32 %v459, 1.442695
  %v461 = vpow.pop %v460
  %v462 = vadd.f32 %v461, 1.0
  %v463 = vrcp.pop %v462
  %v464 = vmul.f32 1.0, %v463
  %v465 = vtanh.pop %v458
  %v466 = vmul.f32 %v464, %v326
  %468 = vrot.lane.b32.xlu0 %v465, 64
  %v469 = vpop.permute.xlu0 %468
  %v471 = vmul.f32 %v464, %v469
  %473 = vrot.lane.b32.xlu0 %v471, 32
  %v474 = vpop.permute.xlu0 %473
  %v476 = vadd.f32 %v466, %v474
  %v477 = vtanh.pop %v476
  %479 = vrot.lane.b32.xlu0 %v477, 64
  %v480 = vpop.permute.xlu0 %479
  %v482 = vmul.f32 %v464, %v480
  %v483 = vpack.c.bf16 %v404, %v404
  %485 = vrot.lane.b32.xlu0 %v483, 32
  %v486 = vpop.permute.xlu0 %485
  %v488 = vsel %vm159, %v486, 0
  %490 = vmatprep.subr.bf16.mxu0 0
  %491 = vmatpush1.bf16.msra.mxu0 0
  %492 = vmatprep.subr.bf16.mxu0 0
  %493 = vmatpush1.bf16.msra.mxu0 0
  %494 = vmatprep.subr.bf16.mxu0 0
  %495 = vmatpush1.bf16.msra.mxu0 0
  %496 = vmatprep.subr.bf16.mxu0 0
  %497 = vmatpush1.bf16.msra.mxu0 0
  %498 = vmatprep.subr.bf16.mxu0 0
  %499 = vmatpush1.bf16.msra.mxu0 0
  %500 = vmatprep.subr.bf16.mxu0 0
  %501 = vmatpush1.bf16.msra.mxu0 0
  %502 = vmatprep.subr.bf16.mxu0 0
  %503 = vmatpush1.bf16.msra.mxu0 %v156
  %504 = vmatprep.subr.bf16.mxu0 0
  %505 = vmatpush1.bf16.msra.mxu0 %v155
  %506 = vmatprep.subr.bf16.mxu0 0
  %507 = vmatpush2.bf16.msra.mxu0 0
  %508 = vmatprep.subr.bf16.mxu0 0
  %509 = vmatpush2.bf16.msra.mxu0 0
  %510 = vmatprep.subr.bf16.mxu0 0
  %511 = vmatpush2.bf16.msra.mxu0 0
  %512 = vmatprep.subr.bf16.mxu0 0
  %513 = vmatpush2.bf16.msra.mxu0 0
  %514 = vmatprep.subr.bf16.mxu0 0
  %515 = vmatpush2.bf16.msra.mxu0 0
  %516 = vmatprep.subr.bf16.mxu0 0
  %517 = vmatpush2.bf16.msra.mxu0 0
  %518 = vmatprep.subr.bf16.mxu0 0
  %519 = vmatpush2.bf16.msra.mxu0 0
  %520 = vmatprep.subr.bf16.mxu0 0
  %521 = vmatpush2.bf16.msra.mxu0 0
  %522 = vmatprep.mubr.bf16.mxu0 0
  %523 = vmatmul.mubr.bf16.gmra.mxu0 %v488
  %v524 = vpop.f32.mrf.mxu0
  %v525 = vadd.f32 0.0, %v524
  %v526 = vpop.f32.mrf.mxu0
  %v527 = vpop.f32.mrf.mxu0
  %v528 = vpop.f32.mrf.mxu0
  %529 = vdwg.mxu0
  %v530 = vadd.f32 %v112, %v525
  %v531 = vxor.u32 %v530, 2147483648
  %v532 = vmul.f32 %v531, 1.442695
  %v533 = vpow.pop %v532
  %v534 = vadd.f32 %v533, 1.0
  %v535 = vrcp.pop %v534
  %v536 = vmul.f32 1.0, %v535
  %v537 = vtanh.pop %v530
  %v538 = vmul.f32 %v536, %v398
  %540 = vrot.lane.b32.xlu0 %v537, 64
  %v541 = vpop.permute.xlu0 %540
  %v543 = vmul.f32 %v536, %v541
  %545 = vrot.lane.b32.xlu0 %v543, 32
  %v546 = vpop.permute.xlu0 %545
  %v548 = vadd.f32 %v538, %v546
  %v549 = vtanh.pop %v548
  %551 = vrot.lane.b32.xlu0 %v549, 64
  %v552 = vpop.permute.xlu0 %551
  %v554 = vmul.f32 %v536, %v552
  %556 = vrot.lane.b32.xlu0 %v554, 32
  %v557 = vpop.permute.xlu0 %556
  %560 = vrot.lane.b32.xlu0 %v482, 64
  %v561 = vpop.permute.xlu0 %560
  %v563 = vsel %vm159, %v557, %v561
  %v564 = vpack.c.bf16 %v563, %v563
  %v566 = vsel %vm258, %v564, 0
  %568 = vmatprep.subr.bf16.mxu0 0
  %569 = vmatpush1.bf16.msra.mxu0 0
  %570 = vmatprep.subr.bf16.mxu0 0
  %571 = vmatpush1.bf16.msra.mxu0 0
  %572 = vmatprep.subr.bf16.mxu0 0
  %573 = vmatpush1.bf16.msra.mxu0 0
  %574 = vmatprep.subr.bf16.mxu0 0
  %575 = vmatpush1.bf16.msra.mxu0 0
  %576 = vmatprep.subr.bf16.mxu0 0
  %577 = vmatpush1.bf16.msra.mxu0 %v253
  %578 = vmatprep.subr.bf16.mxu0 0
  %579 = vmatpush1.bf16.msra.mxu0 %v252
  %580 = vmatprep.subr.bf16.mxu0 0
  %581 = vmatpush1.bf16.msra.mxu0 %v251
  %582 = vmatprep.subr.bf16.mxu0 0
  %583 = vmatpush1.bf16.msra.mxu0 %v250
  %584 = vmatprep.subr.bf16.mxu0 0
  %585 = vmatpush2.bf16.msra.mxu0 0
  %586 = vmatprep.subr.bf16.mxu0 0
  %587 = vmatpush2.bf16.msra.mxu0 0
  %588 = vmatprep.subr.bf16.mxu0 0
  %589 = vmatpush2.bf16.msra.mxu0 0
  %590 = vmatprep.subr.bf16.mxu0 0
  %591 = vmatpush2.bf16.msra.mxu0 0
  %592 = vmatprep.subr.bf16.mxu0 0
  %593 = vmatpush2.bf16.msra.mxu0 0
  %594 = vmatprep.subr.bf16.mxu0 0
  %595 = vmatpush2.bf16.msra.mxu0 0
  %596 = vmatprep.subr.bf16.mxu0 0
  %597 = vmatpush2.bf16.msra.mxu0 0
  %598 = vmatprep.subr.bf16.mxu0 0
  %599 = vmatpush2.bf16.msra.mxu0 0
  %600 = vmatprep.mubr.bf16.mxu0 0
  %601 = vmatmul.mubr.bf16.gmra.mxu0 %v566
  %v602 = vpop.f32.mrf.mxu0
  %v603 = vadd.f32 0.0, %v602
  %v604 = vpop.f32.mrf.mxu0
  %v605 = vpop.f32.mrf.mxu0
  %v606 = vpop.f32.mrf.mxu0
  %607 = vdwg.mxu0
  %v608 = vadd.f32 %v306, %v603
  %v609 = vxor.u32 %v608, 2147483648
  %v610 = vmul.f32 %v609, 1.442695
  %v611 = vpow.pop %v610
  %v612 = vadd.f32 %v611, 1.0
  %v613 = vrcp.pop %v612
  %v614 = vmul.f32 1.0, %v613
  %v615 = vtanh.pop %v608
  %v616 = vmul.f32 %v614, %v476
  %618 = vrot.lane.b32.xlu0 %v615, 64
  %v619 = vpop.permute.xlu0 %618
  %v621 = vmul.f32 %v614, %v619
  %623 = vrot.lane.b32.xlu0 %v621, 32
  %v624 = vpop.permute.xlu0 %623
  %v626 = vadd.f32 %v616, %v624
  %v627 = vtanh.pop %v626
  %629 = vrot.lane.b32.xlu0 %v627, 64
  %v630 = vpop.permute.xlu0 %629
  %v632 = vmul.f32 %v614, %v630
  %v633 = vpack.c.bf16 %v554, %v554
  %635 = vrot.lane.b32.xlu0 %v633, 32
  %v636 = vpop.permute.xlu0 %635
  %v638 = vsel %vm159, %v636, 0
  %640 = vmatprep.subr.bf16.mxu0 0
  %641 = vmatpush1.bf16.msra.mxu0 0
  %642 = vmatprep.subr.bf16.mxu0 0
  %643 = vmatpush1.bf16.msra.mxu0 0
  %644 = vmatprep.subr.bf16.mxu0 0
  %645 = vmatpush1.bf16.msra.mxu0 0
  %646 = vmatprep.subr.bf16.mxu0 0
  %647 = vmatpush1.bf16.msra.mxu0 0
  %648 = vmatprep.subr.bf16.mxu0 0
  %649 = vmatpush1.bf16.msra.mxu0 0
  %650 = vmatprep.subr.bf16.mxu0 0
  %651 = vmatpush1.bf16.msra.mxu0 0
  %652 = vmatprep.subr.bf16.mxu0 0
  %653 = vmatpush1.bf16.msra.mxu0 %v156
  %654 = vmatprep.subr.bf16.mxu0 0
  %655 = vmatpush1.bf16.msra.mxu0 %v155
  %656 = vmatprep.subr.bf16.mxu0 0
  %657 = vmatpush2.bf16.msra.mxu0 0
  %658 = vmatprep.subr.bf16.mxu0 0
  %659 = vmatpush2.bf16.msra.mxu0 0
  %660 = vmatprep.subr.bf16.mxu0 0
  %661 = vmatpush2.bf16.msra.mxu0 0
  %662 = vmatprep.subr.bf16.mxu0 0
  %663 = vmatpush2.bf16.msra.mxu0 0
  %664 = vmatprep.subr.bf16.mxu0 0
  %665 = vmatpush2.bf16.msra.mxu0 0
  %666 = vmatprep.subr.bf16.mxu0 0
  %667 = vmatpush2.bf16.msra.mxu0 0
  %668 = vmatprep.subr.bf16.mxu0 0
  %669 = vmatpush2.bf16.msra.mxu0 0
  %670 = vmatprep.subr.bf16.mxu0 0
  %671 = vmatpush2.bf16.msra.mxu0 0
  %672 = vmatprep.mubr.bf16.mxu0 0
  %673 = vmatmul.mubr.bf16.gmra.mxu0 %v638
  %v674 = vpop.f32.mrf.mxu0
  %v675 = vadd.f32 0.0, %v674
  %v676 = vpop.f32.mrf.mxu0
  %v677 = vpop.f32.mrf.mxu0
  %v678 = vpop.f32.mrf.mxu0
  %679 = vdwg.mxu0
  %v680 = vadd.f32 %v115, %v675
  %v681 = vxor.u32 %v680, 2147483648
  %v682 = vmul.f32 %v681, 1.442695
  %v683 = vpow.pop %v682
  %v684 = vadd.f32 %v683, 1.0
  %v685 = vrcp.pop %v684
  %v686 = vmul.f32 1.0, %v685
  %v687 = vtanh.pop %v680
  %v688 = vmul.f32 %v686, %v548
  %690 = vrot.lane.b32.xlu0 %v687, 64
  %v691 = vpop.permute.xlu0 %690
  %v693 = vmul.f32 %v686, %v691
  %695 = vrot.lane.b32.xlu0 %v693, 32
  %v696 = vpop.permute.xlu0 %695
  %v698 = vadd.f32 %v688, %v696
  %v699 = vtanh.pop %v698
  %701 = vrot.lane.b32.xlu0 %v699, 64
  %v702 = vpop.permute.xlu0 %701
  %v704 = vmul.f32 %v686, %v702
  %706 = vrot.lane.b32.xlu0 %v704, 32
  %v707 = vpop.permute.xlu0 %706
  %710 = vrot.lane.b32.xlu0 %v632, 64
  %v711 = vpop.permute.xlu0 %710
  %v713 = vsel %vm159, %v707, %v711
  %v714 = vpack.c.bf16 %v713, %v713
  %v716 = vsel %vm258, %v714, 0
  %718 = vmatprep.subr.bf16.mxu0 0
  %719 = vmatpush1.bf16.msra.mxu0 0
  %720 = vmatprep.subr.bf16.mxu0 0
  %721 = vmatpush1.bf16.msra.mxu0 0
  %722 = vmatprep.subr.bf16.mxu0 0
  %723 = vmatpush1.bf16.msra.mxu0 0
  %724 = vmatprep.subr.bf16.mxu0 0
  %725 = vmatpush1.bf16.msra.mxu0 0
  %726 = vmatprep.subr.bf16.mxu0 0
  %727 = vmatpush1.bf16.msra.mxu0 %v253
  %728 = vmatprep.subr.bf16.mxu0 0
  %729 = vmatpush1.bf16.msra.mxu0 %v252
  %730 = vmatprep.subr.bf16.mxu0 0
  %731 = vmatpush1.bf16.msra.mxu0 %v251
  %732 = vmatprep.subr.bf16.mxu0 0
  %733 = vmatpush1.bf16.msra.mxu0 %v250
  %734 = vmatprep.subr.bf16.mxu0 0
  %735 = vmatpush2.bf16.msra.mxu0 0
  %736 = vmatprep.subr.bf16.mxu0 0
  %737 = vmatpush2.bf16.msra.mxu0 0
  %738 = vmatprep.subr.bf16.mxu0 0
  %739 = vmatpush2.bf16.msra.mxu0 0
  %740 = vmatprep.subr.bf16.mxu0 0
  %741 = vmatpush2.bf16.msra.mxu0 0
  %742 = vmatprep.subr.bf16.mxu0 0
  %743 = vmatpush2.bf16.msra.mxu0 0
  %744 = vmatprep.subr.bf16.mxu0 0
  %745 = vmatpush2.bf16.msra.mxu0 0
  %746 = vmatprep.subr.bf16.mxu0 0
  %747 = vmatpush2.bf16.msra.mxu0 0
  %748 = vmatprep.subr.bf16.mxu0 0
  %749 = vmatpush2.bf16.msra.mxu0 0
  %750 = vmatprep.mubr.bf16.mxu0 0
  %751 = vmatmul.mubr.bf16.gmra.mxu0 %v716
  %v752 = vpop.f32.mrf.mxu0
  %v753 = vadd.f32 0.0, %v752
  %v754 = vpop.f32.mrf.mxu0
  %v755 = vpop.f32.mrf.mxu0
  %v756 = vpop.f32.mrf.mxu0
  %757 = vdwg.mxu0
  %v758 = vadd.f32 %v306, %v753
  %v759 = vxor.u32 %v758, 2147483648
  %v760 = vmul.f32 %v759, 1.442695
  %v761 = vpow.pop %v760
  %v762 = vadd.f32 %v761, 1.0
  %v763 = vrcp.pop %v762
  %v764 = vmul.f32 1.0, %v763
  %v765 = vtanh.pop %v758
  %v766 = vmul.f32 %v764, %v626
  %768 = vrot.lane.b32.xlu0 %v765, 64
  %v769 = vpop.permute.xlu0 %768
  %v771 = vmul.f32 %v764, %v769
  %773 = vrot.lane.b32.xlu0 %v771, 32
  %v774 = vpop.permute.xlu0 %773
  %v776 = vadd.f32 %v766, %v774
  %v777 = vtanh.pop %v776
  %779 = vrot.lane.b32.xlu0 %v777, 64
  %v780 = vpop.permute.xlu0 %779
  %v782 = vmul.f32 %v764, %v780
  %v783 = vpack.c.bf16 %v704, %v704
  %785 = vrot.lane.b32.xlu0 %v783, 32
  %v786 = vpop.permute.xlu0 %785
  %v788 = vsel %vm159, %v786, 0
  %790 = vmatprep.subr.bf16.mxu0 0
  %791 = vmatpush1.bf16.msra.mxu0 0
  %792 = vmatprep.subr.bf16.mxu0 0
  %793 = vmatpush1.bf16.msra.mxu0 0
  %794 = vmatprep.subr.bf16.mxu0 0
  %795 = vmatpush1.bf16.msra.mxu0 0
  %796 = vmatprep.subr.bf16.mxu0 0
  %797 = vmatpush1.bf16.msra.mxu0 0
  %798 = vmatprep.subr.bf16.mxu0 0
  %799 = vmatpush1.bf16.msra.mxu0 0
  %800 = vmatprep.subr.bf16.mxu0 0
  %801 = vmatpush1.bf16.msra.mxu0 0
  %802 = vmatprep.subr.bf16.mxu0 0
  %803 = vmatpush1.bf16.msra.mxu0 %v156
  %804 = vmatprep.subr.bf16.mxu0 0
  %805 = vmatpush1.bf16.msra.mxu0 %v155
  %806 = vmatprep.subr.bf16.mxu0 0
  %807 = vmatpush2.bf16.msra.mxu0 0
  %808 = vmatprep.subr.bf16.mxu0 0
  %809 = vmatpush2.bf16.msra.mxu0 0
  %810 = vmatprep.subr.bf16.mxu0 0
  %811 = vmatpush2.bf16.msra.mxu0 0
  %812 = vmatprep.subr.bf16.mxu0 0
  %813 = vmatpush2.bf16.msra.mxu0 0
  %814 = vmatprep.subr.bf16.mxu0 0
  %815 = vmatpush2.bf16.msra.mxu0 0
  %816 = vmatprep.subr.bf16.mxu0 0
  %817 = vmatpush2.bf16.msra.mxu0 0
  %818 = vmatprep.subr.bf16.mxu0 0
  %819 = vmatpush2.bf16.msra.mxu0 0
  %820 = vmatprep.subr.bf16.mxu0 0
  %821 = vmatpush2.bf16.msra.mxu0 0
  %822 = vmatprep.mubr.bf16.mxu0 0
  %823 = vmatmul.mubr.bf16.gmra.mxu0 %v788
  %v824 = vpop.f32.mrf.mxu0
  %v825 = vadd.f32 0.0, %v824
  %v826 = vpop.f32.mrf.mxu0
  %v827 = vpop.f32.mrf.mxu0
  %v828 = vpop.f32.mrf.mxu0
  %829 = vdwg.mxu0
  %v830 = vadd.f32 %v120, %v825
  %v831 = vxor.u32 %v830, 2147483648
  %v832 = vmul.f32 %v831, 1.442695
  %v833 = vpow.pop %v832
  %v834 = vadd.f32 %v833, 1.0
  %v835 = vrcp.pop %v834
  %v836 = vmul.f32 1.0, %v835
  %v837 = vtanh.pop %v830
  %v838 = vmul.f32 %v836, %v698
  %840 = vrot.lane.b32.xlu0 %v837, 64
  %v841 = vpop.permute.xlu0 %840
  %v843 = vmul.f32 %v836, %v841
  %845 = vrot.lane.b32.xlu0 %v843, 32
  %v846 = vpop.permute.xlu0 %845
  %v848 = vadd.f32 %v838, %v846
  %v849 = vtanh.pop %v848
  %851 = vrot.lane.b32.xlu0 %v849, 64
  %v852 = vpop.permute.xlu0 %851
  %v854 = vmul.f32 %v836, %v852
  %856 = vrot.lane.b32.xlu0 %v854, 32
  %v857 = vpop.permute.xlu0 %856
  %860 = vrot.lane.b32.xlu0 %v782, 64
  %v861 = vpop.permute.xlu0 %860
  %v863 = vsel %vm159, %v857, %v861
  %v864 = vpack.c.bf16 %v863, %v863
  %v866 = vsel %vm258, %v864, 0
  %868 = vmatprep.subr.bf16.mxu0 0
  %869 = vmatpush1.bf16.msra.mxu0 0
  %870 = vmatprep.subr.bf16.mxu0 0
  %871 = vmatpush1.bf16.msra.mxu0 0
  %872 = vmatprep.subr.bf16.mxu0 0
  %873 = vmatpush1.bf16.msra.mxu0 0
  %874 = vmatprep.subr.bf16.mxu0 0
  %875 = vmatpush1.bf16.msra.mxu0 0
  %876 = vmatprep.subr.bf16.mxu0 0
  %877 = vmatpush1.bf16.msra.mxu0 %v253
  %878 = vmatprep.subr.bf16.mxu0 0
  %879 = vmatpush1.bf16.msra.mxu0 %v252
  %880 = vmatprep.subr.bf16.mxu0 0
  %881 = vmatpush1.bf16.msra.mxu0 %v251
  %882 = vmatprep.subr.bf16.mxu0 0
  %883 = vmatpush1.bf16.msra.mxu0 %v250
  %884 = vmatprep.subr.bf16.mxu0 0
  %885 = vmatpush2.bf16.msra.mxu0 0
  %886 = vmatprep.subr.bf16.mxu0 0
  %887 = vmatpush2.bf16.msra.mxu0 0
  %888 = vmatprep.subr.bf16.mxu0 0
  %889 = vmatpush2.bf16.msra.mxu0 0
  %890 = vmatprep.subr.bf16.mxu0 0
  %891 = vmatpush2.bf16.msra.mxu0 0
  %892 = vmatprep.subr.bf16.mxu0 0
  %893 = vmatpush2.bf16.msra.mxu0 0
  %894 = vmatprep.subr.bf16.mxu0 0
  %895 = vmatpush2.bf16.msra.mxu0 0
  %896 = vmatprep.subr.bf16.mxu0 0
  %897 = vmatpush2.bf16.msra.mxu0 0
  %898 = vmatprep.subr.bf16.mxu0 0
  %899 = vmatpush2.bf16.msra.mxu0 0
  %900 = vmatprep.mubr.bf16.mxu0 0
  %901 = vmatmul.mubr.bf16.gmra.mxu0 %v866
  %v902 = vpop.f32.mrf.mxu0
  %v903 = vadd.f32 0.0, %v902
  %v904 = vpop.f32.mrf.mxu0
  %v905 = vpop.f32.mrf.mxu0
  %v906 = vpop.f32.mrf.mxu0
  %907 = vdwg.mxu0
  %v908 = vadd.f32 %v306, %v903
  %v909 = vxor.u32 %v908, 2147483648
  %v910 = vmul.f32 %v909, 1.442695
  %v911 = vpow.pop %v910
  %v912 = vadd.f32 %v911, 1.0
  %v913 = vrcp.pop %v912
  %v914 = vmul.f32 1.0, %v913
  %v915 = vtanh.pop %v908
  %v916 = vmul.f32 %v914, %v776
  %918 = vrot.lane.b32.xlu0 %v915, 64
  %v919 = vpop.permute.xlu0 %918
  %v921 = vmul.f32 %v914, %v919
  %923 = vrot.lane.b32.xlu0 %v921, 32
  %v924 = vpop.permute.xlu0 %923
  %v926 = vadd.f32 %v916, %v924
  %v927 = vtanh.pop %v926
  %929 = vrot.lane.b32.xlu0 %v927, 64
  %v930 = vpop.permute.xlu0 %929
  %v932 = vmul.f32 %v914, %v930
  %v933 = vpack.c.bf16 %v854, %v854
  %935 = vrot.lane.b32.xlu0 %v933, 32
  %v936 = vpop.permute.xlu0 %935
  %v938 = vsel %vm159, %v936, 0
  %940 = vmatprep.subr.bf16.mxu0 0
  %941 = vmatpush1.bf16.msra.mxu0 0
  %942 = vmatprep.subr.bf16.mxu0 0
  %943 = vmatpush1.bf16.msra.mxu0 0
  %944 = vmatprep.subr.bf16.mxu0 0
  %945 = vmatpush1.bf16.msra.mxu0 0
  %946 = vmatprep.subr.bf16.mxu0 0
  %947 = vmatpush1.bf16.msra.mxu0 0
  %948 = vmatprep.subr.bf16.mxu0 0
  %949 = vmatpush1.bf16.msra.mxu0 0
  %950 = vmatprep.subr.bf16.mxu0 0
  %951 = vmatpush1.bf16.msra.mxu0 0
  %952 = vmatprep.subr.bf16.mxu0 0
  %953 = vmatpush1.bf16.msra.mxu0 %v156
  %954 = vmatprep.subr.bf16.mxu0 0
  %955 = vmatpush1.bf16.msra.mxu0 %v155
  %956 = vmatprep.subr.bf16.mxu0 0
  %957 = vmatpush2.bf16.msra.mxu0 0
  %958 = vmatprep.subr.bf16.mxu0 0
  %959 = vmatpush2.bf16.msra.mxu0 0
  %960 = vmatprep.subr.bf16.mxu0 0
  %961 = vmatpush2.bf16.msra.mxu0 0
  %962 = vmatprep.subr.bf16.mxu0 0
  %963 = vmatpush2.bf16.msra.mxu0 0
  %964 = vmatprep.subr.bf16.mxu0 0
  %965 = vmatpush2.bf16.msra.mxu0 0
  %966 = vmatprep.subr.bf16.mxu0 0
  %967 = vmatpush2.bf16.msra.mxu0 0
  %968 = vmatprep.subr.bf16.mxu0 0
  %969 = vmatpush2.bf16.msra.mxu0 0
  %970 = vmatprep.subr.bf16.mxu0 0
  %971 = vmatpush2.bf16.msra.mxu0 0
  %972 = vmatprep.mubr.bf16.mxu0 0
  %973 = vmatmul.mubr.bf16.gmra.mxu0 %v938
  %v974 = vpop.f32.mrf.mxu0
  %v975 = vadd.f32 0.0, %v974
  %v976 = vpop.f32.mrf.mxu0
  %v977 = vpop.f32.mrf.mxu0
  %v978 = vpop.f32.mrf.mxu0
  %979 = vdwg.mxu0
  %v980 = vadd.f32 %v123, %v975
  %v981 = vxor.u32 %v980, 2147483648
  %v982 = vmul.f32 %v981, 1.442695
  %v983 = vpow.pop %v982
  %v984 = vadd.f32 %v983, 1.0
  %v985 = vrcp.pop %v984
  %v986 = vmul.f32 1.0, %v985
  %v987 = vtanh.pop %v980
  %v988 = vmul.f32 %v986, %v848
  %990 = vrot.lane.b32.xlu0 %v987, 64
  %v991 = vpop.permute.xlu0 %990
  %v993 = vmul.f32 %v986, %v991
  %995 = vrot.lane.b32.xlu0 %v993, 32
  %v996 = vpop.permute.xlu0 %995
  %v998 = vadd.f32 %v988, %v996
  %v999 = vtanh.pop %v998
  %1001 = vrot.lane.b32.xlu0 %v999, 64
  %v1002 = vpop.permute.xlu0 %1001
  %v1004 = vmul.f32 %v986, %v1002
  %1006 = vrot.lane.b32.xlu0 %v1004, 32
  %v1007 = vpop.permute.xlu0 %1006
  %1010 = vrot.lane.b32.xlu0 %v932, 64
  %v1011 = vpop.permute.xlu0 %1010
  %v1013 = vsel %vm159, %v1007, %v1011
  %v1014 = vpack.c.bf16 %v1013, %v1013
  %v1016 = vsel %vm258, %v1014, 0
  %1018 = vmatprep.subr.bf16.mxu0 0
  %1019 = vmatpush1.bf16.msra.mxu0 0
  %1020 = vmatprep.subr.bf16.mxu0 0
  %1021 = vmatpush1.bf16.msra.mxu0 0
  %1022 = vmatprep.subr.bf16.mxu0 0
  %1023 = vmatpush1.bf16.msra.mxu0 0
  %1024 = vmatprep.subr.bf16.mxu0 0
  %1025 = vmatpush1.bf16.msra.mxu0 0
  %1026 = vmatprep.subr.bf16.mxu0 0
  %1027 = vmatpush1.bf16.msra.mxu0 %v253
  %1028 = vmatprep.subr.bf16.mxu0 0
  %1029 = vmatpush1.bf16.msra.mxu0 %v252
  %1030 = vmatprep.subr.bf16.mxu0 0
  %1031 = vmatpush1.bf16.msra.mxu0 %v251
  %1032 = vmatprep.subr.bf16.mxu0 0
  %1033 = vmatpush1.bf16.msra.mxu0 %v250
  %1034 = vmatprep.subr.bf16.mxu0 0
  %1035 = vmatpush2.bf16.msra.mxu0 0
  %1036 = vmatprep.subr.bf16.mxu0 0
  %1037 = vmatpush2.bf16.msra.mxu0 0
  %1038 = vmatprep.subr.bf16.mxu0 0
  %1039 = vmatpush2.bf16.msra.mxu0 0
  %1040 = vmatprep.subr.bf16.mxu0 0
  %1041 = vmatpush2.bf16.msra.mxu0 0
  %1042 = vmatprep.subr.bf16.mxu0 0
  %1043 = vmatpush2.bf16.msra.mxu0 0
  %1044 = vmatprep.subr.bf16.mxu0 0
  %1045 = vmatpush2.bf16.msra.mxu0 0
  %1046 = vmatprep.subr.bf16.mxu0 0
  %1047 = vmatpush2.bf16.msra.mxu0 0
  %1048 = vmatprep.subr.bf16.mxu0 0
  %1049 = vmatpush2.bf16.msra.mxu0 0
  %1050 = vmatprep.mubr.bf16.mxu0 0
  %1051 = vmatmul.mubr.bf16.gmra.mxu0 %v1016
  %v1052 = vpop.f32.mrf.mxu0
  %v1053 = vadd.f32 0.0, %v1052
  %v1054 = vpop.f32.mrf.mxu0
  %v1055 = vpop.f32.mrf.mxu0
  %v1056 = vpop.f32.mrf.mxu0
  %1057 = vdwg.mxu0
  %v1058 = vadd.f32 %v306, %v1053
  %v1059 = vxor.u32 %v1058, 2147483648
  %v1060 = vmul.f32 %v1059, 1.442695
  %v1061 = vpow.pop %v1060
  %v1062 = vadd.f32 %v1061, 1.0
  %v1063 = vrcp.pop %v1062
  %v1064 = vmul.f32 1.0, %v1063
  %v1065 = vtanh.pop %v1058
  %v1066 = vmul.f32 %v1064, %v926
  %1068 = vrot.lane.b32.xlu0 %v1065, 64
  %v1069 = vpop.permute.xlu0 %1068
  %v1071 = vmul.f32 %v1064, %v1069
  %1073 = vrot.lane.b32.xlu0 %v1071, 32
  %v1074 = vpop.permute.xlu0 %1073
  %v1076 = vadd.f32 %v1066, %v1074
  %v1077 = vtanh.pop %v1076
  %1079 = vrot.lane.b32.xlu0 %v1077, 64
  %v1080 = vpop.permute.xlu0 %1079
  %v1082 = vmul.f32 %v1064, %v1080
  %v1083 = vpack.c.bf16 %v1004, %v1004
  %1085 = vrot.lane.b32.xlu0 %v1083, 32
  %v1086 = vpop.permute.xlu0 %1085
  %v1088 = vsel %vm159, %v1086, 0
  %1090 = vmatprep.subr.bf16.mxu0 0
  %1091 = vmatpush1.bf16.msra.mxu0 0
  %1092 = vmatprep.subr.bf16.mxu0 0
  %1093 = vmatpush1.bf16.msra.mxu0 0
  %1094 = vmatprep.subr.bf16.mxu0 0
  %1095 = vmatpush1.bf16.msra.mxu0 0
  %1096 = vmatprep.subr.bf16.mxu0 0
  %1097 = vmatpush1.bf16.msra.mxu0 0
  %1098 = vmatprep.subr.bf16.mxu0 0
  %1099 = vmatpush1.bf16.msra.mxu0 0
  %1100 = vmatprep.subr.bf16.mxu0 0
  %1101 = vmatpush1.bf16.msra.mxu0 0
  %1102 = vmatprep.subr.bf16.mxu0 0
  %1103 = vmatpush1.bf16.msra.mxu0 %v156
  %1104 = vmatprep.subr.bf16.mxu0 0
  %1105 = vmatpush1.bf16.msra.mxu0 %v155
  %1106 = vmatprep.subr.bf16.mxu0 0
  %1107 = vmatpush2.bf16.msra.mxu0 0
  %1108 = vmatprep.subr.bf16.mxu0 0
  %1109 = vmatpush2.bf16.msra.mxu0 0
  %1110 = vmatprep.subr.bf16.mxu0 0
  %1111 = vmatpush2.bf16.msra.mxu0 0
  %1112 = vmatprep.subr.bf16.mxu0 0
  %1113 = vmatpush2.bf16.msra.mxu0 0
  %1114 = vmatprep.subr.bf16.mxu0 0
  %1115 = vmatpush2.bf16.msra.mxu0 0
  %1116 = vmatprep.subr.bf16.mxu0 0
  %1117 = vmatpush2.bf16.msra.mxu0 0
  %1118 = vmatprep.subr.bf16.mxu0 0
  %1119 = vmatpush2.bf16.msra.mxu0 0
  %1120 = vmatprep.subr.bf16.mxu0 0
  %1121 = vmatpush2.bf16.msra.mxu0 0
  %1122 = vmatprep.mubr.bf16.mxu0 0
  %1123 = vmatmul.mubr.bf16.gmra.mxu0 %v1088
  %v1124 = vpop.f32.mrf.mxu0
  %v1125 = vadd.f32 0.0, %v1124
  %v1126 = vpop.f32.mrf.mxu0
  %v1127 = vpop.f32.mrf.mxu0
  %v1128 = vpop.f32.mrf.mxu0
  %1129 = vdwg.mxu0
  %v1130 = vadd.f32 %v128, %v1125
  %v1131 = vxor.u32 %v1130, 2147483648
  %v1132 = vmul.f32 %v1131, 1.442695
  %v1133 = vpow.pop %v1132
  %v1134 = vadd.f32 %v1133, 1.0
  %v1135 = vrcp.pop %v1134
  %v1136 = vmul.f32 1.0, %v1135
  %v1137 = vtanh.pop %v1130
  %v1138 = vmul.f32 %v1136, %v998
  %1140 = vrot.lane.b32.xlu0 %v1137, 64
  %v1141 = vpop.permute.xlu0 %1140
  %v1143 = vmul.f32 %v1136, %v1141
  %1145 = vrot.lane.b32.xlu0 %v1143, 32
  %v1146 = vpop.permute.xlu0 %1145
  %v1148 = vadd.f32 %v1138, %v1146
  %v1149 = vtanh.pop %v1148
  %1151 = vrot.lane.b32.xlu0 %v1149, 64
  %v1152 = vpop.permute.xlu0 %1151
  %v1154 = vmul.f32 %v1136, %v1152
  %1156 = vrot.lane.b32.xlu0 %v1154, 32
  %v1157 = vpop.permute.xlu0 %1156
  %1160 = vrot.lane.b32.xlu0 %v1082, 64
  %v1161 = vpop.permute.xlu0 %1160
  %v1163 = vsel %vm159, %v1157, %v1161
  %v1164 = vpack.c.bf16 %v1163, %v1163
  %v1166 = vsel %vm258, %v1164, 0
  %1168 = vmatprep.subr.bf16.mxu0 0
  %1169 = vmatpush1.bf16.msra.mxu0 0
  %1170 = vmatprep.subr.bf16.mxu0 0
  %1171 = vmatpush1.bf16.msra.mxu0 0
  %1172 = vmatprep.subr.bf16.mxu0 0
  %1173 = vmatpush1.bf16.msra.mxu0 0
  %1174 = vmatprep.subr.bf16.mxu0 0
  %1175 = vmatpush1.bf16.msra.mxu0 0
  %1176 = vmatprep.subr.bf16.mxu0 0
  %1177 = vmatpush1.bf16.msra.mxu0 %v253
  %1178 = vmatprep.subr.bf16.mxu0 0
  %1179 = vmatpush1.bf16.msra.mxu0 %v252
  %1180 = vmatprep.subr.bf16.mxu0 0
  %1181 = vmatpush1.bf16.msra.mxu0 %v251
  %1182 = vmatprep.subr.bf16.mxu0 0
  %1183 = vmatpush1.bf16.msra.mxu0 %v250
  %1184 = vmatprep.subr.bf16.mxu0 0
  %1185 = vmatpush2.bf16.msra.mxu0 0
  %1186 = vmatprep.subr.bf16.mxu0 0
  %1187 = vmatpush2.bf16.msra.mxu0 0
  %1188 = vmatprep.subr.bf16.mxu0 0
  %1189 = vmatpush2.bf16.msra.mxu0 0
  %1190 = vmatprep.subr.bf16.mxu0 0
  %1191 = vmatpush2.bf16.msra.mxu0 0
  %1192 = vmatprep.subr.bf16.mxu0 0
  %1193 = vmatpush2.bf16.msra.mxu0 0
  %1194 = vmatprep.subr.bf16.mxu0 0
  %1195 = vmatpush2.bf16.msra.mxu0 0
  %1196 = vmatprep.subr.bf16.mxu0 0
  %1197 = vmatpush2.bf16.msra.mxu0 0
  %1198 = vmatprep.subr.bf16.mxu0 0
  %1199 = vmatpush2.bf16.msra.mxu0 0
  %1200 = vmatprep.mubr.bf16.mxu0 0
  %1201 = vmatmul.mubr.bf16.gmra.mxu0 %v1166
  %v1202 = vpop.f32.mrf.mxu0
  %v1203 = vadd.f32 0.0, %v1202
  %v1204 = vpop.f32.mrf.mxu0
  %v1205 = vpop.f32.mrf.mxu0
  %v1206 = vpop.f32.mrf.mxu0
  %1207 = vdwg.mxu0
  %v1208 = vadd.f32 %v306, %v1203
  %v1209 = vxor.u32 %v1208, 2147483648
  %v1210 = vmul.f32 %v1209, 1.442695
  %v1211 = vpow.pop %v1210
  %v1212 = vadd.f32 %v1211, 1.0
  %v1213 = vrcp.pop %v1212
  %v1214 = vmul.f32 1.0, %v1213
  %v1215 = vtanh.pop %v1208
  %v1216 = vmul.f32 %v1214, %v1076
  %1218 = vrot.lane.b32.xlu0 %v1215, 64
  %v1219 = vpop.permute.xlu0 %1218
  %v1221 = vmul.f32 %v1214, %v1219
  %1223 = vrot.lane.b32.xlu0 %v1221, 32
  %v1224 = vpop.permute.xlu0 %1223
  %v1226 = vadd.f32 %v1216, %v1224
  %v1227 = vtanh.pop %v1226
  %1229 = vrot.lane.b32.xlu0 %v1227, 64
  %v1230 = vpop.permute.xlu0 %1229
  %v1232 = vmul.f32 %v1214, %v1230
  %v1233 = vpack.c.bf16 %v1154, %v1154
  %1235 = vrot.lane.b32.xlu0 %v1233, 32
  %v1236 = vpop.permute.xlu0 %1235
  %v1238 = vsel %vm159, %v1236, 0
  %1240 = vmatprep.subr.bf16.mxu0 0
  %1241 = vmatpush1.bf16.msra.mxu0 0
  %1242 = vmatprep.subr.bf16.mxu0 0
  %1243 = vmatpush1.bf16.msra.mxu0 0
  %1244 = vmatprep.subr.bf16.mxu0 0
  %1245 = vmatpush1.bf16.msra.mxu0 0
  %1246 = vmatprep.subr.bf16.mxu0 0
  %1247 = vmatpush1.bf16.msra.mxu0 0
  %1248 = vmatprep.subr.bf16.mxu0 0
  %1249 = vmatpush1.bf16.msra.mxu0 0
  %1250 = vmatprep.subr.bf16.mxu0 0
  %1251 = vmatpush1.bf16.msra.mxu0 0
  %1252 = vmatprep.subr.bf16.mxu0 0
  %1253 = vmatpush1.bf16.msra.mxu0 %v156
  %1254 = vmatprep.subr.bf16.mxu0 0
  %1255 = vmatpush1.bf16.msra.mxu0 %v155
  %1256 = vmatprep.subr.bf16.mxu0 0
  %1257 = vmatpush2.bf16.msra.mxu0 0
  %1258 = vmatprep.subr.bf16.mxu0 0
  %1259 = vmatpush2.bf16.msra.mxu0 0
  %1260 = vmatprep.subr.bf16.mxu0 0
  %1261 = vmatpush2.bf16.msra.mxu0 0
  %1262 = vmatprep.subr.bf16.mxu0 0
  %1263 = vmatpush2.bf16.msra.mxu0 0
  %1264 = vmatprep.subr.bf16.mxu0 0
  %1265 = vmatpush2.bf16.msra.mxu0 0
  %1266 = vmatprep.subr.bf16.mxu0 0
  %1267 = vmatpush2.bf16.msra.mxu0 0
  %1268 = vmatprep.subr.bf16.mxu0 0
  %1269 = vmatpush2.bf16.msra.mxu0 0
  %1270 = vmatprep.subr.bf16.mxu0 0
  %1271 = vmatpush2.bf16.msra.mxu0 0
  %1272 = vmatprep.mubr.bf16.mxu0 0
  %1273 = vmatmul.mubr.bf16.gmra.mxu0 %v1238
  %v1274 = vpop.f32.mrf.mxu0
  %v1275 = vadd.f32 0.0, %v1274
  %v1276 = vpop.f32.mrf.mxu0
  %v1277 = vpop.f32.mrf.mxu0
  %v1278 = vpop.f32.mrf.mxu0
  %1279 = vdwg.mxu0
  %v1280 = vadd.f32 %v131, %v1275
  %v1281 = vxor.u32 %v1280, 2147483648
  %v1282 = vmul.f32 %v1281, 1.442695
  %v1283 = vpow.pop %v1282
  %v1284 = vadd.f32 %v1283, 1.0
  %v1285 = vrcp.pop %v1284
  %v1286 = vmul.f32 1.0, %v1285
  %v1287 = vtanh.pop %v1280
  %v1288 = vmul.f32 %v1286, %v1148
  %1290 = vrot.lane.b32.xlu0 %v1287, 64
  %v1291 = vpop.permute.xlu0 %1290
  %v1293 = vmul.f32 %v1286, %v1291
  %1295 = vrot.lane.b32.xlu0 %v1293, 32
  %v1296 = vpop.permute.xlu0 %1295
  %v1298 = vadd.f32 %v1288, %v1296
  %v1299 = vtanh.pop %v1298
  %1301 = vrot.lane.b32.xlu0 %v1299, 64
  %v1302 = vpop.permute.xlu0 %1301
  %v1304 = vmul.f32 %v1286, %v1302
  %1306 = vrot.lane.b32.xlu0 %v1304, 32
  %v1307 = vpop.permute.xlu0 %1306
  %1310 = vrot.lane.b32.xlu0 %v1232, 64
  %v1311 = vpop.permute.xlu0 %1310
  %v1313 = vsel %vm159, %v1307, %v1311
  %v1314 = vpack.c.bf16 %v1313, %v1313
  %v1316 = vsel %vm258, %v1314, 0
  %1318 = vmatprep.subr.bf16.mxu0 0
  %1319 = vmatpush1.bf16.msra.mxu0 0
  %1320 = vmatprep.subr.bf16.mxu0 0
  %1321 = vmatpush1.bf16.msra.mxu0 0
  %1322 = vmatprep.subr.bf16.mxu0 0
  %1323 = vmatpush1.bf16.msra.mxu0 0
  %1324 = vmatprep.subr.bf16.mxu0 0
  %1325 = vmatpush1.bf16.msra.mxu0 0
  %1326 = vmatprep.subr.bf16.mxu0 0
  %1327 = vmatpush1.bf16.msra.mxu0 %v253
  %1328 = vmatprep.subr.bf16.mxu0 0
  %1329 = vmatpush1.bf16.msra.mxu0 %v252
  %1330 = vmatprep.subr.bf16.mxu0 0
  %1331 = vmatpush1.bf16.msra.mxu0 %v251
  %1332 = vmatprep.subr.bf16.mxu0 0
  %1333 = vmatpush1.bf16.msra.mxu0 %v250
  %1334 = vmatprep.subr.bf16.mxu0 0
  %1335 = vmatpush2.bf16.msra.mxu0 0
  %1336 = vmatprep.subr.bf16.mxu0 0
  %1337 = vmatpush2.bf16.msra.mxu0 0
  %1338 = vmatprep.subr.bf16.mxu0 0
  %1339 = vmatpush2.bf16.msra.mxu0 0
  %1340 = vmatprep.subr.bf16.mxu0 0
  %1341 = vmatpush2.bf16.msra.mxu0 0
  %1342 = vmatprep.subr.bf16.mxu0 0
  %1343 = vmatpush2.bf16.msra.mxu0 0
  %1344 = vmatprep.subr.bf16.mxu0 0
  %1345 = vmatpush2.bf16.msra.mxu0 0
  %1346 = vmatprep.subr.bf16.mxu0 0
  %1347 = vmatpush2.bf16.msra.mxu0 0
  %1348 = vmatprep.subr.bf16.mxu0 0
  %1349 = vmatpush2.bf16.msra.mxu0 0
  %1350 = vmatprep.mubr.bf16.mxu0 0
  %1351 = vmatmul.mubr.bf16.gmra.mxu0 %v1316
  %v1352 = vpop.f32.mrf.mxu0
  %v1353 = vadd.f32 0.0, %v1352
  %v1354 = vpop.f32.mrf.mxu0
  %v1355 = vpop.f32.mrf.mxu0
  %v1356 = vpop.f32.mrf.mxu0
  %1357 = vdwg.mxu0
  %v1358 = vadd.f32 %v306, %v1353
  %v1359 = vxor.u32 %v1358, 2147483648
  %v1360 = vmul.f32 %v1359, 1.442695
  %v1361 = vpow.pop %v1360
  %v1362 = vadd.f32 %v1361, 1.0
  %v1363 = vrcp.pop %v1362
  %v1364 = vmul.f32 1.0, %v1363
  %v1365 = vtanh.pop %v1358
  %v1366 = vmul.f32 %v1364, %v1226
  %1368 = vrot.lane.b32.xlu0 %v1365, 64
  %v1369 = vpop.permute.xlu0 %1368
  %v1371 = vmul.f32 %v1364, %v1369
  %1373 = vrot.lane.b32.xlu0 %v1371, 32
  %v1374 = vpop.permute.xlu0 %1373
  %v1376 = vadd.f32 %v1366, %v1374
  %v1377 = vtanh.pop %v1376
  %1379 = vrot.lane.b32.xlu0 %v1377, 64
  %v1380 = vpop.permute.xlu0 %1379
  %v1382 = vmul.f32 %v1364, %v1380
  %v1383 = vld [vmem:[%s6] sm:$0x1]
  %v1385 = vlaneseq
  %v1386 = vshrl.u32 %v1385, 7
  %v1387 = vsub.s32 0, %v1386
  %v1388 = vrot.slane %v1383, %v1387
  %1389 = vrot.lane.b32.xlu0 %v1388, 96
  %v1390 = vpop.permute.xlu0 %1389
  %v1392 = vmul.f32 %v1382, %v1390
  %1394 = vrot.lane.b32.xlu0 %v1392, 32
  %v1395 = vpop.permute.xlu0 %1394
  %v1397 = vsel %vm159, %v1395, 0.0
  %1398 = vadd.xlane.f32.xlu0 %v1397
  %v1399 = vpop.xlane.xlu0 %1398
  %v1400 = vld [vmem:[#allocation2] sm:$0x1]
  %v1402 = vlaneseq
  %v1403 = vshrl.u32 %v1402, 7
  %v1404 = vsub.s32 0, %v1403
  %v1405 = vrot.slane %v1400, %v1404
  %v1407 = vadd.f32 %v1399, %v1405
  %1409 = vset.pattern.permute.xlu0 0
  %1410 = vperm.xlu0 %1409, %v1407
  %v1411 = vpop.permute.xlu0 %1410
  %1413 = vst [vmem:[%s8] sm:$0xff] %v1411
  // Predicated region
  $region34: #{multivariate_lstm_forward.1} parent=0 // pred_check
    _
  $region35: #{multivariate_lstm_forward.1} parent=0 // pred_check_branch
    %1415 = sbr.rel (0) target = $region37
  $region36: #{multivariate_lstm_forward.1} parent=0 // pred_region
    _
  $region37: #{multivariate_lstm_forward.1} parent=0 // pred_fallthru
    _
  // Predicated region
  $region38: #{multivariate_lstm_forward.1} parent=0 // pred_check
    _
  $region39: #{multivariate_lstm_forward.1} parent=0 // pred_check_branch
    %1417 = sbr.rel (0) target = $region41
  $region40: #{multivariate_lstm_forward.1} parent=0 // pred_region
    _
  $region41: #{multivariate_lstm_forward.1} parent=0 // pred_fallthru
    _

</llo_original>
